<compile_context>
chip_gen: v5e
topology: v5e:2x2
jax: 0.10.0
libtpu: 0.0.40
codegen_flags: <defaults>
</compile_context>

<pallas_src>
import functools

import numpy as np

import jax
import jax.numpy as jnp
from jax.experimental import pallas as pl
from jax.experimental.pallas import tpu as pltpu


def _round_up(x, m):
    return ((x + m - 1) // m) * m


# ----------------------------------------------------------------------------
# Host-side parameter packing (done ONCE, outside jit)
# ----------------------------------------------------------------------------
def _permute_gates_ifog(w, H):
    """Reorder gate columns [i|f|g|o] -> [i|f|o|g] on the last axis."""
    w = np.asarray(w, np.float32)
    return np.concatenate(
        [w[..., 0 * H:1 * H], w[..., 1 * H:2 * H],
         w[..., 3 * H:4 * H], w[..., 2 * H:3 * H]], axis=-1)


def pack_params(params, *, B, T):
    """Pack all weights + constant permutation matrices into one (R, blob_w) blob."""
    input_dim = int(params["lin"][0][0].shape[0])
    linear_dim = int(params["lin"][0][0].shape[1])
    H = int(params["lstm"][0][1].shape[0])          # w_hh: (H, 4H)
    output_dim = int(params["out"][0].shape[1])
    four_h = 4 * H
    Bp = _round_up(B, 8)                            # f32 sublane tile padding
    out_w = _round_up(output_dim, 128)              # lane-dense output width
    blob_w = _round_up(max(128, four_h, linear_dim, output_dim, B * T, T * Bp), 128)

    pieces, layout = [], {}
    offset = 0

    def add(name, mat, cols_used):
        nonlocal offset
        mat = np.asarray(mat, np.float32)
        rows_used = mat.shape[0]
        rows_p = _round_up(max(rows_used, 1), 8)
        buf = np.zeros((rows_p, blob_w), np.float32)
        buf[:rows_used, :mat.shape[1]] = mat
        layout[name] = (offset, rows_p, rows_used, cols_used)
        pieces.append(buf)
        offset += rows_p

    # Constant 0/1 permutation matrices (applied on the MXU inside the kernel):
    #  P: batch-major rows (b*T+t) -> time-major padded rows (t*Bp+b), pad rows = 0
    #  Q: time-major padded rows   -> batch-major rows
    #  Pb: (Bp, B) zero-pads h0/c0 from B to Bp rows.
    P = np.zeros((T * Bp, B * T), np.float32)
    Q = np.zeros((B * T, T * Bp), np.float32)
    for t in range(T):
        for b in range(B):
            P[t * Bp + b, b * T + t] = 1.0
            Q[b * T + t, t * Bp + b] = 1.0
    add("P", P, B * T)
    add("Q", Q, T * Bp)
    add("Pb", np.eye(Bp, B, dtype=np.float32), B)

    for i, (w, b) in enumerate(params["lin"]):
        add(f"lin_w{i}", w, linear_dim)
        add(f"lin_b{i}", b, linear_dim)
    for l, (w_ih, w_hh, bias) in enumerate(params["lstm"]):
        add(f"wih{l}", _permute_gates_ifog(w_ih, H), four_h)
        add(f"whh{l}", _permute_gates_ifog(w_hh, H), four_h)
        add(f"lstm_b{l}", _permute_gates_ifog(bias, H), four_h)
    w_out, b_out = params["out"]
    add("w_out", w_out, out_w)          # zero-padded cols -> lane-dense output
    add("b_out", b_out, out_w)

    blob = np.concatenate(pieces, axis=0)
    meta = dict(layout=layout, blob_w=blob_w, out_w=out_w, Bp=Bp, B=B, T=T,
                n_lin=len(params["lin"]), n_lstm=len(params["lstm"]),
                input_dim=input_dim, linear_dim=linear_dim,
                hidden_dim=H, output_dim=output_dim)
    return jnp.asarray(blob), meta


# ----------------------------------------------------------------------------
# Fused Pallas kernel: MLP head -> LSTM stack -> output projection
# ----------------------------------------------------------------------------
def build_lstm_decoder_forward(meta, dtype=jnp.float32):
    layout = meta["layout"]
    blob_w, out_w, Bp = meta["blob_w"], meta["out_w"], meta["Bp"]
    B, T = meta["B"], meta["T"]
    n_lin, L = meta["n_lin"], meta["n_lstm"]
    input_dim, H = meta["input_dim"], meta["hidden_dim"]
    output_dim = meta["output_dim"]
    four_h = 4 * H
    f32 = jnp.float32

    def kernel(blob_ref, x_ref, h0_ref, c0_ref, out_ref, hN_ref, cN_ref,
               gx_sc, seq_sc):
        def blk(name):
            off, rows_p, rows, cols = layout[name]
            v = blob_ref[pl.ds(off, rows_p), :]
            if rows != rows_p or cols != blob_w:
                v = v[:rows, :cols]
            return v

        # ---- MLP head (row-wise, batch-major rows; dropout = identity) -----
        y = x_ref[...].astype(f32)                               # (B*T, D_in)
        for i in range(n_lin):
            y = jnp.dot(y, blk(f"lin_w{i}"), preferred_element_type=f32) \
                + blk(f"lin_b{i}")
            y = jnp.maximum(y, 0.0)                              # (B*T, lin_dim)

        # One-off layout conversion on the MXU: batch-major -> time-major with
        # the batch padded to Bp sublanes (pad rows are exactly zero).
        y_tm = jnp.dot(blk("P"), y, preferred_element_type=f32)  # (T*Bp, lin_dim)
        pb = blk("Pb")                                           # (Bp, B)

        # ---- LSTM stack -----------------------------------------------------
        for l in range(L):
            # NOTE: for l>=1 seq_sc is read in full here, BEFORE the time loop
            # below overwrites it in place; program order on the ref keeps this
            # correct -- do not move this read after the recurrence.
            seq_in = y_tm if l == 0 else seq_sc[...].reshape(T * Bp, H)

            # Hoisted input projection: one matmul over ALL timesteps.
            gx = jnp.dot(seq_in, blk(f"wih{l}"), preferred_element_type=f32) \
                 + blk(f"lstm_b{l}")                             # (T*Bp, 4H)
            gx_sc[...] = gx.reshape(T, Bp, four_h)

            # W_hh resident across steps (fine at small H).
            # TODO(synk): for large H, re-read whh from blob_ref inside the step
            # and cast matmul operands to bf16 (keep f32 cell state).
            whh = blk(f"whh{l}")                                 # (H, 4H)

            # Zero-pad the initial state from B to Bp rows via a tiny matmul.
            h = jnp.dot(pb, h0_ref[l].astype(f32), preferred_element_type=f32)
            c = jnp.dot(pb, c0_ref[l].astype(f32), preferred_element_type=f32)

            def step(t, h, c):
                # Gate columns are pre-permuted to [i, f, o, g]: one sigmoid over
                # the contiguous first 3H lanes + one tanh over the last H lanes.
                gates = gx_sc[t] + jnp.dot(h, whh, preferred_element_type=f32)
                sig = jax.nn.sigmoid(gates[:, :3 * H])
                i_g = sig[:, 0 * H:1 * H]
                f_g = sig[:, 1 * H:2 * H]
                o_g = sig[:, 2 * H:3 * H]
                g_g = jnp.tanh(gates[:, 3 * H:])
                c_new = f_g * c + i_g * g_g
                h_new = o_g * jnp.tanh(c_new)
                seq_sc[t] = h_new                     # tile-aligned (Bp, H) store
                return h_new, c_new

            if T <= 32:
                # Small static T: fully unrolled (per-step grid/loop overhead = 0).
                for t in range(T):
                    h, c = step(t, h, c)
            else:
                # Large T: bounded code size / live ranges.
                def body(t, hc):
                    return step(t, *hc)
                h, c = jax.lax.fori_loop(0, T, body, (h, c), unroll=2)

            hN_ref[l] = h[:B, :].astype(hN_ref.dtype)
            cN_ref[l] = c[:B, :].astype(cN_ref.dtype)

        # ---- Output projection: back to batch-major rows, lane-dense cols ---
        seq_bt = jnp.dot(blk("Q"), seq_sc[...].reshape(T * Bp, H),
                         preferred_element_type=f32)             # (B*T, H)
        out = jnp.dot(seq_bt, blk("w_out"), preferred_element_type=f32) \
              + blk("b_out")                                     # (B*T, out_w)
        out_ref[...] = out.astype(out_ref.dtype)

    call = pl.pallas_call(
        kernel,
        out_shape=(jax.ShapeDtypeStruct((B * T, out_w), dtype),
                   jax.ShapeDtypeStruct((L, B, H), dtype),
                   jax.ShapeDtypeStruct((L, B, H), dtype)),
        scratch_shapes=[pltpu.VMEM((T, Bp, four_h), jnp.float32),
                        pltpu.VMEM((T, Bp, H), jnp.float32)],
    )

    def forward(blob, x, hidden):
        h0, c0 = hidden
        x2d = x.reshape(B * T, input_dim)            # free reshape, no transpose
        out2d, hN, cN = call(blob, x2d, h0, c0)
        out = out2d[:, :output_dim].reshape(B, T, output_dim)
        return out, (hN, cN)

    return jax.jit(forward)


# ----------------------------------------------------------------------------
# Parameter construction (deterministic, PyTorch-style uniform init)
# ----------------------------------------------------------------------------
def _uniform(key, shape, fan_in):
    k = 1.0 / jnp.sqrt(jnp.float32(fan_in))
    return jax.random.uniform(key, shape, jnp.float32, -k, k)


def make_params(key, input_dim, linear_dim, num_linear_layers,
                hidden_dim, num_lstm_layers, output_dim):
    params = {"lin": [], "lstm": []}
    keys = jax.random.split(key, 4 * (num_linear_layers + 2 * num_lstm_layers) + 8)
    ki = iter(range(len(keys)))

    in_d = input_dim
    for _ in range(max(num_linear_layers, 1)):
        w = _uniform(keys[next(ki)], (in_d, linear_dim), in_d)          # transposed
        b = _uniform(keys[next(ki)], (1, linear_dim), in_d)
        params["lin"].append((w, b))
        in_d = linear_dim

    lstm_in = linear_dim
    for _ in range(num_lstm_layers):
        w_ih = _uniform(keys[next(ki)], (lstm_in, 4 * hidden_dim), hidden_dim)
        w_hh = _uniform(keys[next(ki)], (hidden_dim, 4 * hidden_dim), hidden_dim)
        b_ih = _uniform(keys[next(ki)], (1, 4 * hidden_dim), hidden_dim)
        b_hh = _uniform(keys[next(ki)], (1, 4 * hidden_dim), hidden_dim)
        params["lstm"].append((w_ih, w_hh, b_ih + b_hh))
        lstm_in = hidden_dim

    w_out = _uniform(keys[next(ki)], (hidden_dim, output_dim), hidden_dim)
    b_out = _uniform(keys[next(ki)], (1, output_dim), hidden_dim)
    params["out"] = (w_out, b_out)
    return params


# ----------------------------------------------------------------------------
# Pure-JAX reference (standard [i,f,g,o] gate order) for correctness check
# ----------------------------------------------------------------------------
def reference_forward(params, x_btd, hidden):
    h0_all, c0_all = hidden
    y = x_btd
    for (w, b) in params["lin"]:
        y = jnp.maximum(y @ w + b[0], 0.0)

    x_tbi = jnp.transpose(y, (1, 0, 2))
    h_finals, c_finals = [], []
    for l, (w_ih, w_hh, bias) in enumerate(params["lstm"]):
        H = w_hh.shape[0]

        def step(carry, x_t):
            h, c = carry
            gates = x_t @ w_ih + h @ w_hh + bias[0]
            i = jax.nn.sigmoid(gates[:, 0 * H:1 * H])
            f = jax.nn.sigmoid(gates[:, 1 * H:2 * H])
            g = jnp.tanh(gates[:, 2 * H:3 * H])
            o = jax.nn.sigmoid(gates[:, 3 * H:4 * H])
            c = f * c + i * g
            h = o * jnp.tanh(c)
            return (h, c), h

        (hN, cN), ys = jax.lax.scan(step, (h0_all[l], c0_all[l]), x_tbi)
        x_tbi = ys
        h_finals.append(hN)
        c_finals.append(cN)
    lstm_out = jnp.transpose(x_tbi, (1, 0, 2))
    w_out, b_out = params["out"]
    out = lstm_out @ w_out + b_out[0]
    return out, (jnp.stack(h_finals, 0), jnp.stack(c_finals, 0))


# ----------------------------------------------------------------------------
if __name__ == "__main__":
    B, T = 2, 8
    input_dim, linear_dim, num_linear_layers = 10, 32, 2
    hidden_dim, num_lstm_layers, output_dim = 32, 2, 6

    key = jax.random.PRNGKey(0)
    k_param, k_x, k_h, k_c = jax.random.split(key, 4)

    params = make_params(k_param, input_dim, linear_dim, num_linear_layers,
                         hidden_dim, num_lstm_layers, output_dim)

    blob, meta = pack_params(params, B=B, T=T)
    fwd = build_lstm_decoder_forward(meta, dtype=jnp.float32)

    x = jax.random.normal(k_x, (B, T, input_dim), jnp.float32)
    h0 = 0.1 * jax.random.normal(k_h, (num_lstm_layers, B, hidden_dim), jnp.float32)
    c0 = 0.1 * jax.random.normal(k_c, (num_lstm_layers, B, hidden_dim), jnp.float32)

    out, (hN, cN) = fwd(blob, x, (h0, c0))
    jax.block_until_ready(out)
    jax.block_until_ready(hN)
    jax.block_until_ready(cN)

    ref_out, (ref_h, ref_c) = reference_forward(params, x, (h0, c0))
    assert out.shape == (B, T, output_dim)
    assert hN.shape == (num_lstm_layers, B, hidden_dim)
    assert cN.shape == (num_lstm_layers, B, hidden_dim)
    assert jnp.allclose(out, ref_out, atol=1e-4, rtol=1e-4)
    assert jnp.allclose(hN, ref_h, atol=1e-4, rtol=1e-4)
    assert jnp.allclose(cN, ref_c, atol=1e-4, rtol=1e-4)

    print("KERNEL_OK")
</pallas_src>

<mosaic_0001>
module attributes {stable_mosaic.version = 11 : i64} {
  func.func @kernel(%arg0: memref<336x128xf32, #tpu.memory_space<vmem>>, %arg1: memref<16x10xf32, #tpu.memory_space<vmem>>, %arg2: memref<2x2x32xf32, #tpu.memory_space<vmem>>, %arg3: memref<2x2x32xf32, #tpu.memory_space<vmem>>, %arg4: memref<16x128xf32, #tpu.memory_space<vmem>>, %arg5: memref<2x2x32xf32, #tpu.memory_space<vmem>>, %arg6: memref<2x2x32xf32, #tpu.memory_space<vmem>>, %arg7: memref<8x8x128xf32, #tpu.memory_space<vmem>>, %arg8: memref<8x8x32xf32, #tpu.memory_space<vmem>>) attributes {dimension_semantics = [], scalar_prefetch = 0 : i64, scratch_operands = 2 : i64, tpu.core_type = #tpu.core_type<tc>} {
    %c0 = arith.constant 0 : index
    %c0_0 = arith.constant 0 : index
    %0 = vector.load %arg1[%c0, %c0_0] : memref<16x10xf32, #tpu.memory_space<vmem>>, vector<16x10xf32>
    %c88 = arith.constant 88 : index
    %c0_1 = arith.constant 0 : index
    %1 = vector.load %arg0[%c88, %c0_1] : memref<336x128xf32, #tpu.memory_space<vmem>>, vector<16x128xf32>
    %2 = vector.extract_strided_slice %1 {offsets = [0, 0], sizes = [10, 32], strides = [1, 1]} : vector<16x128xf32> to vector<10x32xf32>
    %cst = arith.constant dense<0.000000e+00> : vector<16x32xf32>
    %3 = tpu.matmul %0, %2, %cst {dimension_numbers = #tpu.dot_dimension_numbers<[1], [0], [0], [1], [0, 0, 1, 1], [], []>} : vector<16x10xf32>, vector<10x32xf32>, vector<16x32xf32> -> vector<16x32xf32>
    %c104 = arith.constant 104 : index
    %c0_2 = arith.constant 0 : index
    %4 = vector.load %arg0[%c104, %c0_2] : memref<336x128xf32, #tpu.memory_space<vmem>>, vector<8x128xf32>
    %5 = vector.extract_strided_slice %4 {offsets = [0, 0], sizes = [1, 32], strides = [1, 1]} : vector<8x128xf32> to vector<1x32xf32>
    %6 = vector.broadcast %5 : vector<1x32xf32> to vector<16x32xf32>
    %7 = arith.addf %3, %6 : vector<16x32xf32>
    %cst_3 = arith.constant 0.000000e+00 : f32
    %8 = vector.broadcast %cst_3 : f32 to vector<16x32xf32>
    %9 = arith.maximumf %7, %8 : vector<16x32xf32>
    %c112 = arith.constant 112 : index
    %c0_4 = arith.constant 0 : index
    %10 = vector.load %arg0[%c112, %c0_4] : memref<336x128xf32, #tpu.memory_space<vmem>>, vector<32x128xf32>
    %11 = vector.extract_strided_slice %10 {offsets = [0, 0], sizes = [32, 32], strides = [1, 1]} : vector<32x128xf32> to vector<32x32xf32>
    %cst_5 = arith.constant dense<0.000000e+00> : vector<16x32xf32>
    %12 = tpu.matmul %9, %11, %cst_5 {dimension_numbers = #tpu.dot_dimension_numbers<[1], [0], [0], [1], [0, 0, 1, 1], [], []>} : vector<16x32xf32>, vector<32x32xf32>, vector<16x32xf32> -> vector<16x32xf32>
    %c144 = arith.constant 144 : index
    %c0_6 = arith.constant 0 : index
    %13 = vector.load %arg0[%c144, %c0_6] : memref<336x128xf32, #tpu.memory_space<vmem>>, vector<8x128xf32>
    %14 = vector.extract_strided_slice %13 {offsets = [0, 0], sizes = [1, 32], strides = [1, 1]} : vector<8x128xf32> to vector<1x32xf32>
    %15 = vector.broadcast %14 : vector<1x32xf32> to vector<16x32xf32>
    %16 = arith.addf %12, %15 : vector<16x32xf32>
    %cst_7 = arith.constant 0.000000e+00 : f32
    %17 = vector.broadcast %cst_7 : f32 to vector<16x32xf32>
    %18 = arith.maximumf %16, %17 : vector<16x32xf32>
    %c0_8 = arith.constant 0 : index
    %c0_9 = arith.constant 0 : index
    %19 = vector.load %arg0[%c0_8, %c0_9] : memref<336x128xf32, #tpu.memory_space<vmem>>, vector<64x128xf32>
    %20 = vector.extract_strided_slice %19 {offsets = [0, 0], sizes = [64, 16], strides = [1, 1]} : vector<64x128xf32> to vector<64x16xf32>
    %cst_10 = arith.constant dense<0.000000e+00> : vector<64x32xf32>
    %21 = tpu.matmul %20, %18, %cst_10 {dimension_numbers = #tpu.dot_dimension_numbers<[1], [0], [0], [1], [0, 0, 1, 1], [], []>} : vector<64x16xf32>, vector<16x32xf32>, vector<64x32xf32> -> vector<64x32xf32>
    %c80 = arith.constant 80 : index
    %c0_11 = arith.constant 0 : index
    %22 = vector.load %arg0[%c80, %c0_11] : memref<336x128xf32, #tpu.memory_space<vmem>>, vector<8x128xf32>
    %23 = vector.extract_strided_slice %22 {offsets = [0, 0], sizes = [8, 2], strides = [1, 1]} : vector<8x128xf32> to vector<8x2xf32>
    %c152 = arith.constant 152 : index
    %c0_12 = arith.constant 0 : index
    %24 = vector.load %arg0[%c152, %c0_12] : memref<336x128xf32, #tpu.memory_space<vmem>>, vector<32x128xf32>
    %cst_13 = arith.constant dense<0.000000e+00> : vector<64x128xf32>
    %25 = tpu.matmul %21, %24, %cst_13 {dimension_numbers = #tpu.dot_dimension_numbers<[1], [0], [0], [1], [0, 0, 1, 1], [], []>} : vector<64x32xf32>, vector<32x128xf32>, vector<64x128xf32> -> vector<64x128xf32>
    %c216 = arith.constant 216 : index
    %c0_14 = arith.constant 0 : index
    %26 = vector.load %arg0[%c216, %c0_14] : memref<336x128xf32, #tpu.memory_space<vmem>>, vector<8x128xf32>
    %27 = vector.extract_strided_slice %26 {offsets = [0, 0], sizes = [1, 128], strides = [1, 1]} : vector<8x128xf32> to vector<1x128xf32>
    %28 = vector.broadcast %27 : vector<1x128xf32> to vector<64x128xf32>
    %29 = arith.addf %25, %28 : vector<64x128xf32>
    %30 = vector.shape_cast %29 : vector<64x128xf32> to vector<8x8x128xf32>
    %c0_15 = arith.constant 0 : index
    %c0_16 = arith.constant 0 : index
    %c0_17 = arith.constant 0 : index
    %31 = vector.load %arg7[%c0_15, %c0_16, %c0_17] : memref<8x8x128xf32, #tpu.memory_space<vmem>>, vector<8x8x128xf32>
    tpu.vector_store %arg7[%c0_15, %c0_16, %c0_17], %30 {strides = array<i32>} : memref<8x8x128xf32, #tpu.memory_space<vmem>>, vector<8x8x128xf32>,
    %c184 = arith.constant 184 : index
    %c0_18 = arith.constant 0 : index
    %32 = vector.load %arg0[%c184, %c0_18] : memref<336x128xf32, #tpu.memory_space<vmem>>, vector<32x128xf32>
    %c0_19 = arith.constant 0 : index
    %c0_20 = arith.constant 0 : index
    %c0_21 = arith.constant 0 : index
    %33 = vector.load %arg2[%c0_19, %c0_20, %c0_21] : memref<2x2x32xf32, #tpu.memory_space<vmem>>, vector<1x2x32xf32>
    %34 = vector.shape_cast %33 : vector<1x2x32xf32> to vector<2x32xf32>
    %cst_22 = arith.constant dense<0.000000e+00> : vector<8x32xf32>
    %35 = tpu.matmul %23, %34, %cst_22 {dimension_numbers = #tpu.dot_dimension_numbers<[1], [0], [0], [1], [0, 0, 1, 1], [], []>} : vector<8x2xf32>, vector<2x32xf32>, vector<8x32xf32> -> vector<8x32xf32>
    %c0_23 = arith.constant 0 : index
    %c0_24 = arith.constant 0 : index
    %c0_25 = arith.constant 0 : index
    %36 = vector.load %arg3[%c0_23, %c0_24, %c0_25] : memref<2x2x32xf32, #tpu.memory_space<vmem>>, vector<1x2x32xf32>
    %37 = vector.shape_cast %36 : vector<1x2x32xf32> to vector<2x32xf32>
    %cst_26 = arith.constant dense<0.000000e+00> : vector<8x32xf32>
    %38 = tpu.matmul %23, %37, %cst_26 {dimension_numbers = #tpu.dot_dimension_numbers<[1], [0], [0], [1], [0, 0, 1, 1], [], []>} : vector<8x2xf32>, vector<2x32xf32>, vector<8x32xf32> -> vector<8x32xf32>
    %c0_27 = arith.constant 0 : index
    %c0_28 = arith.constant 0 : index
    %c0_29 = arith.constant 0 : index
    %39 = vector.load %arg7[%c0_27, %c0_28, %c0_29] : memref<8x8x128xf32, #tpu.memory_space<vmem>>, vector<1x8x128xf32>
    %40 = vector.shape_cast %39 : vector<1x8x128xf32> to vector<8x128xf32>
    %cst_30 = arith.constant dense<0.000000e+00> : vector<8x128xf32>
    %41 = tpu.matmul %35, %32, %cst_30 {dimension_numbers = #tpu.dot_dimension_numbers<[1], [0], [0], [1], [0, 0, 1, 1], [], []>} : vector<8x32xf32>, vector<32x128xf32>, vector<8x128xf32> -> vector<8x128xf32>
    %42 = arith.addf %40, %41 : vector<8x128xf32>
    %43 = vector.extract_strided_slice %42 {offsets = [0, 0], sizes = [8, 96], strides = [1, 1]} : vector<8x128xf32> to vector<8x96xf32>
    %44 = arith.negf %43 : vector<8x96xf32>
    %45 = math.exp %44 : vector<8x96xf32>
    %cst_31 = arith.constant 1.000000e+00 : f32
    %46 = vector.broadcast %cst_31 : f32 to vector<8x96xf32>
    %47 = arith.addf %46, %45 : vector<8x96xf32>
    %48 = arith.divf %46, %47 : vector<8x96xf32>
    %49 = vector.extract_strided_slice %48 {offsets = [0, 0], sizes = [8, 32], strides = [1, 1]} : vector<8x96xf32> to vector<8x32xf32>
    %50 = vector.extract_strided_slice %48 {offsets = [0, 32], sizes = [8, 32], strides = [1, 1]} : vector<8x96xf32> to vector<8x32xf32>
    %51 = vector.extract_strided_slice %48 {offsets = [0, 64], sizes = [8, 32], strides = [1, 1]} : vector<8x96xf32> to vector<8x32xf32>
    %52 = vector.extract_strided_slice %42 {offsets = [0, 96], sizes = [8, 32], strides = [1, 1]} : vector<8x128xf32> to vector<8x32xf32>
    %53 = math.tanh %52 : vector<8x32xf32>
    %54 = arith.mulf %50, %38 : vector<8x32xf32>
    %55 = arith.mulf %49, %53 : vector<8x32xf32>
    %56 = arith.addf %54, %55 : vector<8x32xf32>
    %57 = math.tanh %56 : vector<8x32xf32>
    %58 = arith.mulf %51, %57 : vector<8x32xf32>
    %c0_32 = arith.constant 0 : index
    %c0_33 = arith.constant 0 : index
    %c0_34 = arith.constant 0 : index
    %59 = vector.load %arg8[%c0_32, %c0_33, %c0_34] : memref<8x8x32xf32, #tpu.memory_space<vmem>>, vector<1x8x32xf32>
    %60 = vector.shape_cast %59 : vector<1x8x32xf32> to vector<8x32xf32>
    %61 = vector.shape_cast %58 : vector<8x32xf32> to vector<1x8x32xf32>
    tpu.vector_store %arg8[%c0_32, %c0_33, %c0_34], %61 {strides = array<i32>} : memref<8x8x32xf32, #tpu.memory_space<vmem>>, vector<1x8x32xf32>,
    %c1 = arith.constant 1 : index
    %c0_35 = arith.constant 0 : index
    %c0_36 = arith.constant 0 : index
    %62 = vector.load %arg7[%c1, %c0_35, %c0_36] : memref<8x8x128xf32, #tpu.memory_space<vmem>>, vector<1x8x128xf32>
    %63 = vector.shape_cast %62 : vector<1x8x128xf32> to vector<8x128xf32>
    %cst_37 = arith.constant dense<0.000000e+00> : vector<8x128xf32>
    %64 = tpu.matmul %58, %32, %cst_37 {dimension_numbers = #tpu.dot_dimension_numbers<[1], [0], [0], [1], [0, 0, 1, 1], [], []>} : vector<8x32xf32>, vector<32x128xf32>, vector<8x128xf32> -> vector<8x128xf32>
    %65 = arith.addf %63, %64 : vector<8x128xf32>
    %66 = vector.extract_strided_slice %65 {offsets = [0, 0], sizes = [8, 96], strides = [1, 1]} : vector<8x128xf32> to vector<8x96xf32>
    %67 = arith.negf %66 : vector<8x96xf32>
    %68 = math.exp %67 : vector<8x96xf32>
    %cst_38 = arith.constant 1.000000e+00 : f32
    %69 = vector.broadcast %cst_38 : f32 to vector<8x96xf32>
    %70 = arith.addf %69, %68 : vector<8x96xf32>
    %71 = arith.divf %69, %70 : vector<8x96xf32>
    %72 = vector.extract_strided_slice %71 {offsets = [0, 0], sizes = [8, 32], strides = [1, 1]} : vector<8x96xf32> to vector<8x32xf32>
    %73 = vector.extract_strided_slice %71 {offsets = [0, 32], sizes = [8, 32], strides = [1, 1]} : vector<8x96xf32> to vector<8x32xf32>
    %74 = vector.extract_strided_slice %71 {offsets = [0, 64], sizes = [8, 32], strides = [1, 1]} : vector<8x96xf32> to vector<8x32xf32>
    %75 = vector.extract_strided_slice %65 {offsets = [0, 96], sizes = [8, 32], strides = [1, 1]} : vector<8x128xf32> to vector<8x32xf32>
    %76 = math.tanh %75 : vector<8x32xf32>
    %77 = arith.mulf %73, %56 : vector<8x32xf32>
    %78 = arith.mulf %72, %76 : vector<8x32xf32>
    %79 = arith.addf %77, %78 : vector<8x32xf32>
    %80 = math.tanh %79 : vector<8x32xf32>
    %81 = arith.mulf %74, %80 : vector<8x32xf32>
    %c1_39 = arith.constant 1 : index
    %c0_40 = arith.constant 0 : index
    %c0_41 = arith.constant 0 : index
    %82 = vector.load %arg8[%c1_39, %c0_40, %c0_41] : memref<8x8x32xf32, #tpu.memory_space<vmem>>, vector<1x8x32xf32>
    %83 = vector.shape_cast %82 : vector<1x8x32xf32> to vector<8x32xf32>
    %84 = vector.shape_cast %81 : vector<8x32xf32> to vector<1x8x32xf32>
    tpu.vector_store %arg8[%c1_39, %c0_40, %c0_41], %84 {strides = array<i32>} : memref<8x8x32xf32, #tpu.memory_space<vmem>>, vector<1x8x32xf32>,
    %c2 = arith.constant 2 : index
    %c0_42 = arith.constant 0 : index
    %c0_43 = arith.constant 0 : index
    %85 = vector.load %arg7[%c2, %c0_42, %c0_43] : memref<8x8x128xf32, #tpu.memory_space<vmem>>, vector<1x8x128xf32>
    %86 = vector.shape_cast %85 : vector<1x8x128xf32> to vector<8x128xf32>
    %cst_44 = arith.constant dense<0.000000e+00> : vector<8x128xf32>
    %87 = tpu.matmul %81, %32, %cst_44 {dimension_numbers = #tpu.dot_dimension_numbers<[1], [0], [0], [1], [0, 0, 1, 1], [], []>} : vector<8x32xf32>, vector<32x128xf32>, vector<8x128xf32> -> vector<8x128xf32>
    %88 = arith.addf %86, %87 : vector<8x128xf32>
    %89 = vector.extract_strided_slice %88 {offsets = [0, 0], sizes = [8, 96], strides = [1, 1]} : vector<8x128xf32> to vector<8x96xf32>
    %90 = arith.negf %89 : vector<8x96xf32>
    %91 = math.exp %90 : vector<8x96xf32>
    %cst_45 = arith.constant 1.000000e+00 : f32
    %92 = vector.broadcast %cst_45 : f32 to vector<8x96xf32>
    %93 = arith.addf %92, %91 : vector<8x96xf32>
    %94 = arith.divf %92, %93 : vector<8x96xf32>
    %95 = vector.extract_strided_slice %94 {offsets = [0, 0], sizes = [8, 32], strides = [1, 1]} : vector<8x96xf32> to vector<8x32xf32>
    %96 = vector.extract_strided_slice %94 {offsets = [0, 32], sizes = [8, 32], strides = [1, 1]} : vector<8x96xf32> to vector<8x32xf32>
    %97 = vector.extract_strided_slice %94 {offsets = [0, 64], sizes = [8, 32], strides = [1, 1]} : vector<8x96xf32> to vector<8x32xf32>
    %98 = vector.extract_strided_slice %88 {offsets = [0, 96], sizes = [8, 32], strides = [1, 1]} : vector<8x128xf32> to vector<8x32xf32>
    %99 = math.tanh %98 : vector<8x32xf32>
    %100 = arith.mulf %96, %79 : vector<8x32xf32>
    %101 = arith.mulf %95, %99 : vector<8x32xf32>
    %102 = arith.addf %100, %101 : vector<8x32xf32>
    %103 = math.tanh %102 : vector<8x32xf32>
    %104 = arith.mulf %97, %103 : vector<8x32xf32>
    %c2_46 = arith.constant 2 : index
    %c0_47 = arith.constant 0 : index
    %c0_48 = arith.constant 0 : index
    %105 = vector.load %arg8[%c2_46, %c0_47, %c0_48] : memref<8x8x32xf32, #tpu.memory_space<vmem>>, vector<1x8x32xf32>
    %106 = vector.shape_cast %105 : vector<1x8x32xf32> to vector<8x32xf32>
    %107 = vector.shape_cast %104 : vector<8x32xf32> to vector<1x8x32xf32>
    tpu.vector_store %arg8[%c2_46, %c0_47, %c0_48], %107 {strides = array<i32>} : memref<8x8x32xf32, #tpu.memory_space<vmem>>, vector<1x8x32xf32>,
    %c3 = arith.constant 3 : index
    %c0_49 = arith.constant 0 : index
    %c0_50 = arith.constant 0 : index
    %108 = vector.load %arg7[%c3, %c0_49, %c0_50] : memref<8x8x128xf32, #tpu.memory_space<vmem>>, vector<1x8x128xf32>
    %109 = vector.shape_cast %108 : vector<1x8x128xf32> to vector<8x128xf32>
    %cst_51 = arith.constant dense<0.000000e+00> : vector<8x128xf32>
    %110 = tpu.matmul %104, %32, %cst_51 {dimension_numbers = #tpu.dot_dimension_numbers<[1], [0], [0], [1], [0, 0, 1, 1], [], []>} : vector<8x32xf32>, vector<32x128xf32>, vector<8x128xf32> -> vector<8x128xf32>
    %111 = arith.addf %109, %110 : vector<8x128xf32>
    %112 = vector.extract_strided_slice %111 {offsets = [0, 0], sizes = [8, 96], strides = [1, 1]} : vector<8x128xf32> to vector<8x96xf32>
    %113 = arith.negf %112 : vector<8x96xf32>
    %114 = math.exp %113 : vector<8x96xf32>
    %cst_52 = arith.constant 1.000000e+00 : f32
    %115 = vector.broadcast %cst_52 : f32 to vector<8x96xf32>
    %116 = arith.addf %115, %114 : vector<8x96xf32>
    %117 = arith.divf %115, %116 : vector<8x96xf32>
    %118 = vector.extract_strided_slice %117 {offsets = [0, 0], sizes = [8, 32], strides = [1, 1]} : vector<8x96xf32> to vector<8x32xf32>
    %119 = vector.extract_strided_slice %117 {offsets = [0, 32], sizes = [8, 32], strides = [1, 1]} : vector<8x96xf32> to vector<8x32xf32>
    %120 = vector.extract_strided_slice %117 {offsets = [0, 64], sizes = [8, 32], strides = [1, 1]} : vector<8x96xf32> to vector<8x32xf32>
    %121 = vector.extract_strided_slice %111 {offsets = [0, 96], sizes = [8, 32], strides = [1, 1]} : vector<8x128xf32> to vector<8x32xf32>
    %122 = math.tanh %121 : vector<8x32xf32>
    %123 = arith.mulf %119, %102 : vector<8x32xf32>
    %124 = arith.mulf %118, %122 : vector<8x32xf32>
    %125 = arith.addf %123, %124 : vector<8x32xf32>
    %126 = math.tanh %125 : vector<8x32xf32>
    %127 = arith.mulf %120, %126 : vector<8x32xf32>
    %c3_53 = arith.constant 3 : index
    %c0_54 = arith.constant 0 : index
    %c0_55 = arith.constant 0 : index
    %128 = vector.load %arg8[%c3_53, %c0_54, %c0_55] : memref<8x8x32xf32, #tpu.memory_space<vmem>>, vector<1x8x32xf32>
    %129 = vector.shape_cast %128 : vector<1x8x32xf32> to vector<8x32xf32>
    %130 = vector.shape_cast %127 : vector<8x32xf32> to vector<1x8x32xf32>
    tpu.vector_store %arg8[%c3_53, %c0_54, %c0_55], %130 {strides = array<i32>} : memref<8x8x32xf32, #tpu.memory_space<vmem>>, vector<1x8x32xf32>,
    %c4 = arith.constant 4 : index
    %c0_56 = arith.constant 0 : index
    %c0_57 = arith.constant 0 : index
    %131 = vector.load %arg7[%c4, %c0_56, %c0_57] : memref<8x8x128xf32, #tpu.memory_space<vmem>>, vector<1x8x128xf32>
    %132 = vector.shape_cast %131 : vector<1x8x128xf32> to vector<8x128xf32>
    %cst_58 = arith.constant dense<0.000000e+00> : vector<8x128xf32>
    %133 = tpu.matmul %127, %32, %cst_58 {dimension_numbers = #tpu.dot_dimension_numbers<[1], [0], [0], [1], [0, 0, 1, 1], [], []>} : vector<8x32xf32>, vector<32x128xf32>, vector<8x128xf32> -> vector<8x128xf32>
    %134 = arith.addf %132, %133 : vector<8x128xf32>
    %135 = vector.extract_strided_slice %134 {offsets = [0, 0], sizes = [8, 96], strides = [1, 1]} : vector<8x128xf32> to vector<8x96xf32>
    %136 = arith.negf %135 : vector<8x96xf32>
    %137 = math.exp %136 : vector<8x96xf32>
    %cst_59 = arith.constant 1.000000e+00 : f32
    %138 = vector.broadcast %cst_59 : f32 to vector<8x96xf32>
    %139 = arith.addf %138, %137 : vector<8x96xf32>
    %140 = arith.divf %138, %139 : vector<8x96xf32>
    %141 = vector.extract_strided_slice %140 {offsets = [0, 0], sizes = [8, 32], strides = [1, 1]} : vector<8x96xf32> to vector<8x32xf32>
    %142 = vector.extract_strided_slice %140 {offsets = [0, 32], sizes = [8, 32], strides = [1, 1]} : vector<8x96xf32> to vector<8x32xf32>
    %143 = vector.extract_strided_slice %140 {offsets = [0, 64], sizes = [8, 32], strides = [1, 1]} : vector<8x96xf32> to vector<8x32xf32>
    %144 = vector.extract_strided_slice %134 {offsets = [0, 96], sizes = [8, 32], strides = [1, 1]} : vector<8x128xf32> to vector<8x32xf32>
    %145 = math.tanh %144 : vector<8x32xf32>
    %146 = arith.mulf %142, %125 : vector<8x32xf32>
    %147 = arith.mulf %141, %145 : vector<8x32xf32>
    %148 = arith.addf %146, %147 : vector<8x32xf32>
    %149 = math.tanh %148 : vector<8x32xf32>
    %150 = arith.mulf %143, %149 : vector<8x32xf32>
    %c4_60 = arith.constant 4 : index
    %c0_61 = arith.constant 0 : index
    %c0_62 = arith.constant 0 : index
    %151 = vector.load %arg8[%c4_60, %c0_61, %c0_62] : memref<8x8x32xf32, #tpu.memory_space<vmem>>, vector<1x8x32xf32>
    %152 = vector.shape_cast %151 : vector<1x8x32xf32> to vector<8x32xf32>
    %153 = vector.shape_cast %150 : vector<8x32xf32> to vector<1x8x32xf32>
    tpu.vector_store %arg8[%c4_60, %c0_61, %c0_62], %153 {strides = array<i32>} : memref<8x8x32xf32, #tpu.memory_space<vmem>>, vector<1x8x32xf32>,
    %c5 = arith.constant 5 : index
    %c0_63 = arith.constant 0 : index
    %c0_64 = arith.constant 0 : index
    %154 = vector.load %arg7[%c5, %c0_63, %c0_64] : memref<8x8x128xf32, #tpu.memory_space<vmem>>, vector<1x8x128xf32>
    %155 = vector.shape_cast %154 : vector<1x8x128xf32> to vector<8x128xf32>
    %cst_65 = arith.constant dense<0.000000e+00> : vector<8x128xf32>
    %156 = tpu.matmul %150, %32, %cst_65 {dimension_numbers = #tpu.dot_dimension_numbers<[1], [0], [0], [1], [0, 0, 1, 1], [], []>} : vector<8x32xf32>, vector<32x128xf32>, vector<8x128xf32> -> vector<8x128xf32>
    %157 = arith.addf %155, %156 : vector<8x128xf32>
    %158 = vector.extract_strided_slice %157 {offsets = [0, 0], sizes = [8, 96], strides = [1, 1]} : vector<8x128xf32> to vector<8x96xf32>
    %159 = arith.negf %158 : vector<8x96xf32>
    %160 = math.exp %159 : vector<8x96xf32>
    %cst_66 = arith.constant 1.000000e+00 : f32
    %161 = vector.broadcast %cst_66 : f32 to vector<8x96xf32>
    %162 = arith.addf %161, %160 : vector<8x96xf32>
    %163 = arith.divf %161, %162 : vector<8x96xf32>
    %164 = vector.extract_strided_slice %163 {offsets = [0, 0], sizes = [8, 32], strides = [1, 1]} : vector<8x96xf32> to vector<8x32xf32>
    %165 = vector.extract_strided_slice %163 {offsets = [0, 32], sizes = [8, 32], strides = [1, 1]} : vector<8x96xf32> to vector<8x32xf32>
    %166 = vector.extract_strided_slice %163 {offsets = [0, 64], sizes = [8, 32], strides = [1, 1]} : vector<8x96xf32> to vector<8x32xf32>
    %167 = vector.extract_strided_slice %157 {offsets = [0, 96], sizes = [8, 32], strides = [1, 1]} : vector<8x128xf32> to vector<8x32xf32>
    %168 = math.tanh %167 : vector<8x32xf32>
    %169 = arith.mulf %165, %148 : vector<8x32xf32>
    %170 = arith.mulf %164, %168 : vector<8x32xf32>
    %171 = arith.addf %169, %170 : vector<8x32xf32>
    %172 = math.tanh %171 : vector<8x32xf32>
    %173 = arith.mulf %166, %172 : vector<8x32xf32>
    %c5_67 = arith.constant 5 : index
    %c0_68 = arith.constant 0 : index
    %c0_69 = arith.constant 0 : index
    %174 = vector.load %arg8[%c5_67, %c0_68, %c0_69] : memref<8x8x32xf32, #tpu.memory_space<vmem>>, vector<1x8x32xf32>
    %175 = vector.shape_cast %174 : vector<1x8x32xf32> to vector<8x32xf32>
    %176 = vector.shape_cast %173 : vector<8x32xf32> to vector<1x8x32xf32>
    tpu.vector_store %arg8[%c5_67, %c0_68, %c0_69], %176 {strides = array<i32>} : memref<8x8x32xf32, #tpu.memory_space<vmem>>, vector<1x8x32xf32>,
    %c6 = arith.constant 6 : index
    %c0_70 = arith.constant 0 : index
    %c0_71 = arith.constant 0 : index
    %177 = vector.load %arg7[%c6, %c0_70, %c0_71] : memref<8x8x128xf32, #tpu.memory_space<vmem>>, vector<1x8x128xf32>
    %178 = vector.shape_cast %177 : vector<1x8x128xf32> to vector<8x128xf32>
    %cst_72 = arith.constant dense<0.000000e+00> : vector<8x128xf32>
    %179 = tpu.matmul %173, %32, %cst_72 {dimension_numbers = #tpu.dot_dimension_numbers<[1], [0], [0], [1], [0, 0, 1, 1], [], []>} : vector<8x32xf32>, vector<32x128xf32>, vector<8x128xf32> -> vector<8x128xf32>
    %180 = arith.addf %178, %179 : vector<8x128xf32>
    %181 = vector.extract_strided_slice %180 {offsets = [0, 0], sizes = [8, 96], strides = [1, 1]} : vector<8x128xf32> to vector<8x96xf32>
    %182 = arith.negf %181 : vector<8x96xf32>
    %183 = math.exp %182 : vector<8x96xf32>
    %cst_73 = arith.constant 1.000000e+00 : f32
    %184 = vector.broadcast %cst_73 : f32 to vector<8x96xf32>
    %185 = arith.addf %184, %183 : vector<8x96xf32>
    %186 = arith.divf %184, %185 : vector<8x96xf32>
    %187 = vector.extract_strided_slice %186 {offsets = [0, 0], sizes = [8, 32], strides = [1, 1]} : vector<8x96xf32> to vector<8x32xf32>
    %188 = vector.extract_strided_slice %186 {offsets = [0, 32], sizes = [8, 32], strides = [1, 1]} : vector<8x96xf32> to vector<8x32xf32>
    %189 = vector.extract_strided_slice %186 {offsets = [0, 64], sizes = [8, 32], strides = [1, 1]} : vector<8x96xf32> to vector<8x32xf32>
    %190 = vector.extract_strided_slice %180 {offsets = [0, 96], sizes = [8, 32], strides = [1, 1]} : vector<8x128xf32> to vector<8x32xf32>
    %191 = math.tanh %190 : vector<8x32xf32>
    %192 = arith.mulf %188, %171 : vector<8x32xf32>
    %193 = arith.mulf %187, %191 : vector<8x32xf32>
    %194 = arith.addf %192, %193 : vector<8x32xf32>
    %195 = math.tanh %194 : vector<8x32xf32>
    %196 = arith.mulf %189, %195 : vector<8x32xf32>
    %c6_74 = arith.constant 6 : index
    %c0_75 = arith.constant 0 : index
    %c0_76 = arith.constant 0 : index
    %197 = vector.load %arg8[%c6_74, %c0_75, %c0_76] : memref<8x8x32xf32, #tpu.memory_space<vmem>>, vector<1x8x32xf32>
    %198 = vector.shape_cast %197 : vector<1x8x32xf32> to vector<8x32xf32>
    %199 = vector.shape_cast %196 : vector<8x32xf32> to vector<1x8x32xf32>
    tpu.vector_store %arg8[%c6_74, %c0_75, %c0_76], %199 {strides = array<i32>} : memref<8x8x32xf32, #tpu.memory_space<vmem>>, vector<1x8x32xf32>,
    %c7 = arith.constant 7 : index
    %c0_77 = arith.constant 0 : index
    %c0_78 = arith.constant 0 : index
    %200 = vector.load %arg7[%c7, %c0_77, %c0_78] : memref<8x8x128xf32, #tpu.memory_space<vmem>>, vector<1x8x128xf32>
    %201 = vector.shape_cast %200 : vector<1x8x128xf32> to vector<8x128xf32>
    %cst_79 = arith.constant dense<0.000000e+00> : vector<8x128xf32>
    %202 = tpu.matmul %196, %32, %cst_79 {dimension_numbers = #tpu.dot_dimension_numbers<[1], [0], [0], [1], [0, 0, 1, 1], [], []>} : vector<8x32xf32>, vector<32x128xf32>, vector<8x128xf32> -> vector<8x128xf32>
    %203 = arith.addf %201, %202 : vector<8x128xf32>
    %204 = vector.extract_strided_slice %203 {offsets = [0, 0], sizes = [8, 96], strides = [1, 1]} : vector<8x128xf32> to vector<8x96xf32>
    %205 = arith.negf %204 : vector<8x96xf32>
    %206 = math.exp %205 : vector<8x96xf32>
    %cst_80 = arith.constant 1.000000e+00 : f32
    %207 = vector.broadcast %cst_80 : f32 to vector<8x96xf32>
    %208 = arith.addf %207, %206 : vector<8x96xf32>
    %209 = arith.divf %207, %208 : vector<8x96xf32>
    %210 = vector.extract_strided_slice %209 {offsets = [0, 0], sizes = [8, 32], strides = [1, 1]} : vector<8x96xf32> to vector<8x32xf32>
    %211 = vector.extract_strided_slice %209 {offsets = [0, 32], sizes = [8, 32], strides = [1, 1]} : vector<8x96xf32> to vector<8x32xf32>
    %212 = vector.extract_strided_slice %209 {offsets = [0, 64], sizes = [8, 32], strides = [1, 1]} : vector<8x96xf32> to vector<8x32xf32>
    %213 = vector.extract_strided_slice %203 {offsets = [0, 96], sizes = [8, 32], strides = [1, 1]} : vector<8x128xf32> to vector<8x32xf32>
    %214 = math.tanh %213 : vector<8x32xf32>
    %215 = arith.mulf %211, %194 : vector<8x32xf32>
    %216 = arith.mulf %210, %214 : vector<8x32xf32>
    %217 = arith.addf %215, %216 : vector<8x32xf32>
    %218 = math.tanh %217 : vector<8x32xf32>
    %219 = arith.mulf %212, %218 : vector<8x32xf32>
    %c7_81 = arith.constant 7 : index
    %c0_82 = arith.constant 0 : index
    %c0_83 = arith.constant 0 : index
    %220 = vector.load %arg8[%c7_81, %c0_82, %c0_83] : memref<8x8x32xf32, #tpu.memory_space<vmem>>, vector<1x8x32xf32>
    %221 = vector.shape_cast %220 : vector<1x8x32xf32> to vector<8x32xf32>
    %222 = vector.shape_cast %219 : vector<8x32xf32> to vector<1x8x32xf32>
    tpu.vector_store %arg8[%c7_81, %c0_82, %c0_83], %222 {strides = array<i32>} : memref<8x8x32xf32, #tpu.memory_space<vmem>>, vector<1x8x32xf32>,
    %223 = vector.extract_strided_slice %219 {offsets = [0, 0], sizes = [2, 32], strides = [1, 1]} : vector<8x32xf32> to vector<2x32xf32>
    %c0_84 = arith.constant 0 : index
    %c0_85 = arith.constant 0 : index
    %c0_86 = arith.constant 0 : index
    %224 = vector.load %arg5[%c0_84, %c0_85, %c0_86] : memref<2x2x32xf32, #tpu.memory_space<vmem>>, vector<1x2x32xf32>
    %225 = vector.shape_cast %224 : vector<1x2x32xf32> to vector<2x32xf32>
    %226 = vector.shape_cast %223 : vector<2x32xf32> to vector<1x2x32xf32>
    tpu.vector_store %arg5[%c0_84, %c0_85, %c0_86], %226 {strides = array<i32>} : memref<2x2x32xf32, #tpu.memory_space<vmem>>, vector<1x2x32xf32>,
    %227 = vector.extract_strided_slice %217 {offsets = [0, 0], sizes = [2, 32], strides = [1, 1]} : vector<8x32xf32> to vector<2x32xf32>
    %c0_87 = arith.constant 0 : index
    %c0_88 = arith.constant 0 : index
    %c0_89 = arith.constant 0 : index
    %228 = vector.load %arg6[%c0_87, %c0_88, %c0_89] : memref<2x2x32xf32, #tpu.memory_space<vmem>>, vector<1x2x32xf32>
    %229 = vector.shape_cast %228 : vector<1x2x32xf32> to vector<2x32xf32>
    %230 = vector.shape_cast %227 : vector<2x32xf32> to vector<1x2x32xf32>
    tpu.vector_store %arg6[%c0_87, %c0_88, %c0_89], %230 {strides = array<i32>} : memref<2x2x32xf32, #tpu.memory_space<vmem>>, vector<1x2x32xf32>,
    %c0_90 = arith.constant 0 : index
    %c0_91 = arith.constant 0 : index
    %c0_92 = arith.constant 0 : index
    %231 = vector.load %arg8[%c0_90, %c0_91, %c0_92] : memref<8x8x32xf32, #tpu.memory_space<vmem>>, vector<8x8x32xf32>
    %232 = vector.shape_cast %231 : vector<8x8x32xf32> to vector<64x32xf32>
    %c224 = arith.constant 224 : index
    %c0_93 = arith.constant 0 : index
    %233 = vector.load %arg0[%c224, %c0_93] : memref<336x128xf32, #tpu.memory_space<vmem>>, vector<32x128xf32>
    %cst_94 = arith.constant dense<0.000000e+00> : vector<64x128xf32>
    %234 = tpu.matmul %232, %233, %cst_94 {dimension_numbers = #tpu.dot_dimension_numbers<[1], [0], [0], [1], [0, 0, 1, 1], [], []>} : vector<64x32xf32>, vector<32x128xf32>, vector<64x128xf32> -> vector<64x128xf32>
    %c288 = arith.constant 288 : index
    %c0_95 = arith.constant 0 : index
    %235 = vector.load %arg0[%c288, %c0_95] : memref<336x128xf32, #tpu.memory_space<vmem>>, vector<8x128xf32>
    %236 = vector.extract_strided_slice %235 {offsets = [0, 0], sizes = [1, 128], strides = [1, 1]} : vector<8x128xf32> to vector<1x128xf32>
    %237 = vector.broadcast %236 : vector<1x128xf32> to vector<64x128xf32>
    %238 = arith.addf %234, %237 : vector<64x128xf32>
    %239 = vector.shape_cast %238 : vector<64x128xf32> to vector<8x8x128xf32>
    %c0_96 = arith.constant 0 : index
    %c0_97 = arith.constant 0 : index
    %c0_98 = arith.constant 0 : index
    %240 = vector.load %arg7[%c0_96, %c0_97, %c0_98] : memref<8x8x128xf32, #tpu.memory_space<vmem>>, vector<8x8x128xf32>
    tpu.vector_store %arg7[%c0_96, %c0_97, %c0_98], %239 {strides = array<i32>} : memref<8x8x128xf32, #tpu.memory_space<vmem>>, vector<8x8x128xf32>,
    %c256 = arith.constant 256 : index
    %c0_99 = arith.constant 0 : index
    %241 = vector.load %arg0[%c256, %c0_99] : memref<336x128xf32, #tpu.memory_space<vmem>>, vector<32x128xf32>
    %c1_100 = arith.constant 1 : index
    %c0_101 = arith.constant 0 : index
    %c0_102 = arith.constant 0 : index
    %242 = vector.load %arg2[%c1_100, %c0_101, %c0_102] : memref<2x2x32xf32, #tpu.memory_space<vmem>>, vector<1x2x32xf32>
    %243 = vector.shape_cast %242 : vector<1x2x32xf32> to vector<2x32xf32>
    %cst_103 = arith.constant dense<0.000000e+00> : vector<8x32xf32>
    %244 = tpu.matmul %23, %243, %cst_103 {dimension_numbers = #tpu.dot_dimension_numbers<[1], [0], [0], [1], [0, 0, 1, 1], [], []>} : vector<8x2xf32>, vector<2x32xf32>, vector<8x32xf32> -> vector<8x32xf32>
    %c1_104 = arith.constant 1 : index
    %c0_105 = arith.constant 0 : index
    %c0_106 = arith.constant 0 : index
    %245 = vector.load %arg3[%c1_104, %c0_105, %c0_106] : memref<2x2x32xf32, #tpu.memory_space<vmem>>, vector<1x2x32xf32>
    %246 = vector.shape_cast %245 : vector<1x2x32xf32> to vector<2x32xf32>
    %cst_107 = arith.constant dense<0.000000e+00> : vector<8x32xf32>
    %247 = tpu.matmul %23, %246, %cst_107 {dimension_numbers = #tpu.dot_dimension_numbers<[1], [0], [0], [1], [0, 0, 1, 1], [], []>} : vector<8x2xf32>, vector<2x32xf32>, vector<8x32xf32> -> vector<8x32xf32>
    %c0_108 = arith.constant 0 : index
    %c0_109 = arith.constant 0 : index
    %c0_110 = arith.constant 0 : index
    %248 = vector.load %arg7[%c0_108, %c0_109, %c0_110] : memref<8x8x128xf32, #tpu.memory_space<vmem>>, vector<1x8x128xf32>
    %249 = vector.shape_cast %248 : vector<1x8x128xf32> to vector<8x128xf32>
    %cst_111 = arith.constant dense<0.000000e+00> : vector<8x128xf32>
    %250 = tpu.matmul %244, %241, %cst_111 {dimension_numbers = #tpu.dot_dimension_numbers<[1], [0], [0], [1], [0, 0, 1, 1], [], []>} : vector<8x32xf32>, vector<32x128xf32>, vector<8x128xf32> -> vector<8x128xf32>
    %251 = arith.addf %249, %250 : vector<8x128xf32>
    %252 = vector.extract_strided_slice %251 {offsets = [0, 0], sizes = [8, 96], strides = [1, 1]} : vector<8x128xf32> to vector<8x96xf32>
    %253 = arith.negf %252 : vector<8x96xf32>
    %254 = math.exp %253 : vector<8x96xf32>
    %cst_112 = arith.constant 1.000000e+00 : f32
    %255 = vector.broadcast %cst_112 : f32 to vector<8x96xf32>
    %256 = arith.addf %255, %254 : vector<8x96xf32>
    %257 = arith.divf %255, %256 : vector<8x96xf32>
    %258 = vector.extract_strided_slice %257 {offsets = [0, 0], sizes = [8, 32], strides = [1, 1]} : vector<8x96xf32> to vector<8x32xf32>
    %259 = vector.extract_strided_slice %257 {offsets = [0, 32], sizes = [8, 32], strides = [1, 1]} : vector<8x96xf32> to vector<8x32xf32>
    %260 = vector.extract_strided_slice %257 {offsets = [0, 64], sizes = [8, 32], strides = [1, 1]} : vector<8x96xf32> to vector<8x32xf32>
    %261 = vector.extract_strided_slice %251 {offsets = [0, 96], sizes = [8, 32], strides = [1, 1]} : vector<8x128xf32> to vector<8x32xf32>
    %262 = math.tanh %261 : vector<8x32xf32>
    %263 = arith.mulf %259, %247 : vector<8x32xf32>
    %264 = arith.mulf %258, %262 : vector<8x32xf32>
    %265 = arith.addf %263, %264 : vector<8x32xf32>
    %266 = math.tanh %265 : vector<8x32xf32>
    %267 = arith.mulf %260, %266 : vector<8x32xf32>
    %c0_113 = arith.constant 0 : index
    %c0_114 = arith.constant 0 : index
    %c0_115 = arith.constant 0 : index
    %268 = vector.load %arg8[%c0_113, %c0_114, %c0_115] : memref<8x8x32xf32, #tpu.memory_space<vmem>>, vector<1x8x32xf32>
    %269 = vector.shape_cast %268 : vector<1x8x32xf32> to vector<8x32xf32>
    %270 = vector.shape_cast %267 : vector<8x32xf32> to vector<1x8x32xf32>
    tpu.vector_store %arg8[%c0_113, %c0_114, %c0_115], %270 {strides = array<i32>} : memref<8x8x32xf32, #tpu.memory_space<vmem>>, vector<1x8x32xf32>,
    %c1_116 = arith.constant 1 : index
    %c0_117 = arith.constant 0 : index
    %c0_118 = arith.constant 0 : index
    %271 = vector.load %arg7[%c1_116, %c0_117, %c0_118] : memref<8x8x128xf32, #tpu.memory_space<vmem>>, vector<1x8x128xf32>
    %272 = vector.shape_cast %271 : vector<1x8x128xf32> to vector<8x128xf32>
    %cst_119 = arith.constant dense<0.000000e+00> : vector<8x128xf32>
    %273 = tpu.matmul %267, %241, %cst_119 {dimension_numbers = #tpu.dot_dimension_numbers<[1], [0], [0], [1], [0, 0, 1, 1], [], []>} : vector<8x32xf32>, vector<32x128xf32>, vector<8x128xf32> -> vector<8x128xf32>
    %274 = arith.addf %272, %273 : vector<8x128xf32>
    %275 = vector.extract_strided_slice %274 {offsets = [0, 0], sizes = [8, 96], strides = [1, 1]} : vector<8x128xf32> to vector<8x96xf32>
    %276 = arith.negf %275 : vector<8x96xf32>
    %277 = math.exp %276 : vector<8x96xf32>
    %cst_120 = arith.constant 1.000000e+00 : f32
    %278 = vector.broadcast %cst_120 : f32 to vector<8x96xf32>
    %279 = arith.addf %278, %277 : vector<8x96xf32>
    %280 = arith.divf %278, %279 : vector<8x96xf32>
    %281 = vector.extract_strided_slice %280 {offsets = [0, 0], sizes = [8, 32], strides = [1, 1]} : vector<8x96xf32> to vector<8x32xf32>
    %282 = vector.extract_strided_slice %280 {offsets = [0, 32], sizes = [8, 32], strides = [1, 1]} : vector<8x96xf32> to vector<8x32xf32>
    %283 = vector.extract_strided_slice %280 {offsets = [0, 64], sizes = [8, 32], strides = [1, 1]} : vector<8x96xf32> to vector<8x32xf32>
    %284 = vector.extract_strided_slice %274 {offsets = [0, 96], sizes = [8, 32], strides = [1, 1]} : vector<8x128xf32> to vector<8x32xf32>
    %285 = math.tanh %284 : vector<8x32xf32>
    %286 = arith.mulf %282, %265 : vector<8x32xf32>
    %287 = arith.mulf %281, %285 : vector<8x32xf32>
    %288 = arith.addf %286, %287 : vector<8x32xf32>
    %289 = math.tanh %288 : vector<8x32xf32>
    %290 = arith.mulf %283, %289 : vector<8x32xf32>
    %c1_121 = arith.constant 1 : index
    %c0_122 = arith.constant 0 : index
    %c0_123 = arith.constant 0 : index
    %291 = vector.load %arg8[%c1_121, %c0_122, %c0_123] : memref<8x8x32xf32, #tpu.memory_space<vmem>>, vector<1x8x32xf32>
    %292 = vector.shape_cast %291 : vector<1x8x32xf32> to vector<8x32xf32>
    %293 = vector.shape_cast %290 : vector<8x32xf32> to vector<1x8x32xf32>
    tpu.vector_store %arg8[%c1_121, %c0_122, %c0_123], %293 {strides = array<i32>} : memref<8x8x32xf32, #tpu.memory_space<vmem>>, vector<1x8x32xf32>,
    %c2_124 = arith.constant 2 : index
    %c0_125 = arith.constant 0 : index
    %c0_126 = arith.constant 0 : index
    %294 = vector.load %arg7[%c2_124, %c0_125, %c0_126] : memref<8x8x128xf32, #tpu.memory_space<vmem>>, vector<1x8x128xf32>
    %295 = vector.shape_cast %294 : vector<1x8x128xf32> to vector<8x128xf32>
    %cst_127 = arith.constant dense<0.000000e+00> : vector<8x128xf32>
    %296 = tpu.matmul %290, %241, %cst_127 {dimension_numbers = #tpu.dot_dimension_numbers<[1], [0], [0], [1], [0, 0, 1, 1], [], []>} : vector<8x32xf32>, vector<32x128xf32>, vector<8x128xf32> -> vector<8x128xf32>
    %297 = arith.addf %295, %296 : vector<8x128xf32>
    %298 = vector.extract_strided_slice %297 {offsets = [0, 0], sizes = [8, 96], strides = [1, 1]} : vector<8x128xf32> to vector<8x96xf32>
    %299 = arith.negf %298 : vector<8x96xf32>
    %300 = math.exp %299 : vector<8x96xf32>
    %cst_128 = arith.constant 1.000000e+00 : f32
    %301 = vector.broadcast %cst_128 : f32 to vector<8x96xf32>
    %302 = arith.addf %301, %300 : vector<8x96xf32>
    %303 = arith.divf %301, %302 : vector<8x96xf32>
    %304 = vector.extract_strided_slice %303 {offsets = [0, 0], sizes = [8, 32], strides = [1, 1]} : vector<8x96xf32> to vector<8x32xf32>
    %305 = vector.extract_strided_slice %303 {offsets = [0, 32], sizes = [8, 32], strides = [1, 1]} : vector<8x96xf32> to vector<8x32xf32>
    %306 = vector.extract_strided_slice %303 {offsets = [0, 64], sizes = [8, 32], strides = [1, 1]} : vector<8x96xf32> to vector<8x32xf32>
    %307 = vector.extract_strided_slice %297 {offsets = [0, 96], sizes = [8, 32], strides = [1, 1]} : vector<8x128xf32> to vector<8x32xf32>
    %308 = math.tanh %307 : vector<8x32xf32>
    %309 = arith.mulf %305, %288 : vector<8x32xf32>
    %310 = arith.mulf %304, %308 : vector<8x32xf32>
    %311 = arith.addf %309, %310 : vector<8x32xf32>
    %312 = math.tanh %311 : vector<8x32xf32>
    %313 = arith.mulf %306, %312 : vector<8x32xf32>
    %c2_129 = arith.constant 2 : index
    %c0_130 = arith.constant 0 : index
    %c0_131 = arith.constant 0 : index
    %314 = vector.load %arg8[%c2_129, %c0_130, %c0_131] : memref<8x8x32xf32, #tpu.memory_space<vmem>>, vector<1x8x32xf32>
    %315 = vector.shape_cast %314 : vector<1x8x32xf32> to vector<8x32xf32>
    %316 = vector.shape_cast %313 : vector<8x32xf32> to vector<1x8x32xf32>
    tpu.vector_store %arg8[%c2_129, %c0_130, %c0_131], %316 {strides = array<i32>} : memref<8x8x32xf32, #tpu.memory_space<vmem>>, vector<1x8x32xf32>,
    %c3_132 = arith.constant 3 : index
    %c0_133 = arith.constant 0 : index
    %c0_134 = arith.constant 0 : index
    %317 = vector.load %arg7[%c3_132, %c0_133, %c0_134] : memref<8x8x128xf32, #tpu.memory_space<vmem>>, vector<1x8x128xf32>
    %318 = vector.shape_cast %317 : vector<1x8x128xf32> to vector<8x128xf32>
    %cst_135 = arith.constant dense<0.000000e+00> : vector<8x128xf32>
    %319 = tpu.matmul %313, %241, %cst_135 {dimension_numbers = #tpu.dot_dimension_numbers<[1], [0], [0], [1], [0, 0, 1, 1], [], []>} : vector<8x32xf32>, vector<32x128xf32>, vector<8x128xf32> -> vector<8x128xf32>
    %320 = arith.addf %318, %319 : vector<8x128xf32>
    %321 = vector.extract_strided_slice %320 {offsets = [0, 0], sizes = [8, 96], strides = [1, 1]} : vector<8x128xf32> to vector<8x96xf32>
    %322 = arith.negf %321 : vector<8x96xf32>
    %323 = math.exp %322 : vector<8x96xf32>
    %cst_136 = arith.constant 1.000000e+00 : f32
    %324 = vector.broadcast %cst_136 : f32 to vector<8x96xf32>
    %325 = arith.addf %324, %323 : vector<8x96xf32>
    %326 = arith.divf %324, %325 : vector<8x96xf32>
    %327 = vector.extract_strided_slice %326 {offsets = [0, 0], sizes = [8, 32], strides = [1, 1]} : vector<8x96xf32> to vector<8x32xf32>
    %328 = vector.extract_strided_slice %326 {offsets = [0, 32], sizes = [8, 32], strides = [1, 1]} : vector<8x96xf32> to vector<8x32xf32>
    %329 = vector.extract_strided_slice %326 {offsets = [0, 64], sizes = [8, 32], strides = [1, 1]} : vector<8x96xf32> to vector<8x32xf32>
    %330 = vector.extract_strided_slice %320 {offsets = [0, 96], sizes = [8, 32], strides = [1, 1]} : vector<8x128xf32> to vector<8x32xf32>
    %331 = math.tanh %330 : vector<8x32xf32>
    %332 = arith.mulf %328, %311 : vector<8x32xf32>
    %333 = arith.mulf %327, %331 : vector<8x32xf32>
    %334 = arith.addf %332, %333 : vector<8x32xf32>
    %335 = math.tanh %334 : vector<8x32xf32>
    %336 = arith.mulf %329, %335 : vector<8x32xf32>
    %c3_137 = arith.constant 3 : index
    %c0_138 = arith.constant 0 : index
    %c0_139 = arith.constant 0 : index
    %337 = vector.load %arg8[%c3_137, %c0_138, %c0_139] : memref<8x8x32xf32, #tpu.memory_space<vmem>>, vector<1x8x32xf32>
    %338 = vector.shape_cast %337 : vector<1x8x32xf32> to vector<8x32xf32>
    %339 = vector.shape_cast %336 : vector<8x32xf32> to vector<1x8x32xf32>
    tpu.vector_store %arg8[%c3_137, %c0_138, %c0_139], %339 {strides = array<i32>} : memref<8x8x32xf32, #tpu.memory_space<vmem>>, vector<1x8x32xf32>,
    %c4_140 = arith.constant 4 : index
    %c0_141 = arith.constant 0 : index
    %c0_142 = arith.constant 0 : index
    %340 = vector.load %arg7[%c4_140, %c0_141, %c0_142] : memref<8x8x128xf32, #tpu.memory_space<vmem>>, vector<1x8x128xf32>
    %341 = vector.shape_cast %340 : vector<1x8x128xf32> to vector<8x128xf32>
    %cst_143 = arith.constant dense<0.000000e+00> : vector<8x128xf32>
    %342 = tpu.matmul %336, %241, %cst_143 {dimension_numbers = #tpu.dot_dimension_numbers<[1], [0], [0], [1], [0, 0, 1, 1], [], []>} : vector<8x32xf32>, vector<32x128xf32>, vector<8x128xf32> -> vector<8x128xf32>
    %343 = arith.addf %341, %342 : vector<8x128xf32>
    %344 = vector.extract_strided_slice %343 {offsets = [0, 0], sizes = [8, 96], strides = [1, 1]} : vector<8x128xf32> to vector<8x96xf32>
    %345 = arith.negf %344 : vector<8x96xf32>
    %346 = math.exp %345 : vector<8x96xf32>
    %cst_144 = arith.constant 1.000000e+00 : f32
    %347 = vector.broadcast %cst_144 : f32 to vector<8x96xf32>
    %348 = arith.addf %347, %346 : vector<8x96xf32>
    %349 = arith.divf %347, %348 : vector<8x96xf32>
    %350 = vector.extract_strided_slice %349 {offsets = [0, 0], sizes = [8, 32], strides = [1, 1]} : vector<8x96xf32> to vector<8x32xf32>
    %351 = vector.extract_strided_slice %349 {offsets = [0, 32], sizes = [8, 32], strides = [1, 1]} : vector<8x96xf32> to vector<8x32xf32>
    %352 = vector.extract_strided_slice %349 {offsets = [0, 64], sizes = [8, 32], strides = [1, 1]} : vector<8x96xf32> to vector<8x32xf32>
    %353 = vector.extract_strided_slice %343 {offsets = [0, 96], sizes = [8, 32], strides = [1, 1]} : vector<8x128xf32> to vector<8x32xf32>
    %354 = math.tanh %353 : vector<8x32xf32>
    %355 = arith.mulf %351, %334 : vector<8x32xf32>
    %356 = arith.mulf %350, %354 : vector<8x32xf32>
    %357 = arith.addf %355, %356 : vector<8x32xf32>
    %358 = math.tanh %357 : vector<8x32xf32>
    %359 = arith.mulf %352, %358 : vector<8x32xf32>
    %c4_145 = arith.constant 4 : index
    %c0_146 = arith.constant 0 : index
    %c0_147 = arith.constant 0 : index
    %360 = vector.load %arg8[%c4_145, %c0_146, %c0_147] : memref<8x8x32xf32, #tpu.memory_space<vmem>>, vector<1x8x32xf32>
    %361 = vector.shape_cast %360 : vector<1x8x32xf32> to vector<8x32xf32>
    %362 = vector.shape_cast %359 : vector<8x32xf32> to vector<1x8x32xf32>
    tpu.vector_store %arg8[%c4_145, %c0_146, %c0_147], %362 {strides = array<i32>} : memref<8x8x32xf32, #tpu.memory_space<vmem>>, vector<1x8x32xf32>,
    %c5_148 = arith.constant 5 : index
    %c0_149 = arith.constant 0 : index
    %c0_150 = arith.constant 0 : index
    %363 = vector.load %arg7[%c5_148, %c0_149, %c0_150] : memref<8x8x128xf32, #tpu.memory_space<vmem>>, vector<1x8x128xf32>
    %364 = vector.shape_cast %363 : vector<1x8x128xf32> to vector<8x128xf32>
    %cst_151 = arith.constant dense<0.000000e+00> : vector<8x128xf32>
    %365 = tpu.matmul %359, %241, %cst_151 {dimension_numbers = #tpu.dot_dimension_numbers<[1], [0], [0], [1], [0, 0, 1, 1], [], []>} : vector<8x32xf32>, vector<32x128xf32>, vector<8x128xf32> -> vector<8x128xf32>
    %366 = arith.addf %364, %365 : vector<8x128xf32>
    %367 = vector.extract_strided_slice %366 {offsets = [0, 0], sizes = [8, 96], strides = [1, 1]} : vector<8x128xf32> to vector<8x96xf32>
    %368 = arith.negf %367 : vector<8x96xf32>
    %369 = math.exp %368 : vector<8x96xf32>
    %cst_152 = arith.constant 1.000000e+00 : f32
    %370 = vector.broadcast %cst_152 : f32 to vector<8x96xf32>
    %371 = arith.addf %370, %369 : vector<8x96xf32>
    %372 = arith.divf %370, %371 : vector<8x96xf32>
    %373 = vector.extract_strided_slice %372 {offsets = [0, 0], sizes = [8, 32], strides = [1, 1]} : vector<8x96xf32> to vector<8x32xf32>
    %374 = vector.extract_strided_slice %372 {offsets = [0, 32], sizes = [8, 32], strides = [1, 1]} : vector<8x96xf32> to vector<8x32xf32>
    %375 = vector.extract_strided_slice %372 {offsets = [0, 64], sizes = [8, 32], strides = [1, 1]} : vector<8x96xf32> to vector<8x32xf32>
    %376 = vector.extract_strided_slice %366 {offsets = [0, 96], sizes = [8, 32], strides = [1, 1]} : vector<8x128xf32> to vector<8x32xf32>
    %377 = math.tanh %376 : vector<8x32xf32>
    %378 = arith.mulf %374, %357 : vector<8x32xf32>
    %379 = arith.mulf %373, %377 : vector<8x32xf32>
    %380 = arith.addf %378, %379 : vector<8x32xf32>
    %381 = math.tanh %380 : vector<8x32xf32>
    %382 = arith.mulf %375, %381 : vector<8x32xf32>
    %c5_153 = arith.constant 5 : index
    %c0_154 = arith.constant 0 : index
    %c0_155 = arith.constant 0 : index
    %383 = vector.load %arg8[%c5_153, %c0_154, %c0_155] : memref<8x8x32xf32, #tpu.memory_space<vmem>>, vector<1x8x32xf32>
    %384 = vector.shape_cast %383 : vector<1x8x32xf32> to vector<8x32xf32>
    %385 = vector.shape_cast %382 : vector<8x32xf32> to vector<1x8x32xf32>
    tpu.vector_store %arg8[%c5_153, %c0_154, %c0_155], %385 {strides = array<i32>} : memref<8x8x32xf32, #tpu.memory_space<vmem>>, vector<1x8x32xf32>,
    %c6_156 = arith.constant 6 : index
    %c0_157 = arith.constant 0 : index
    %c0_158 = arith.constant 0 : index
    %386 = vector.load %arg7[%c6_156, %c0_157, %c0_158] : memref<8x8x128xf32, #tpu.memory_space<vmem>>, vector<1x8x128xf32>
    %387 = vector.shape_cast %386 : vector<1x8x128xf32> to vector<8x128xf32>
    %cst_159 = arith.constant dense<0.000000e+00> : vector<8x128xf32>
    %388 = tpu.matmul %382, %241, %cst_159 {dimension_numbers = #tpu.dot_dimension_numbers<[1], [0], [0], [1], [0, 0, 1, 1], [], []>} : vector<8x32xf32>, vector<32x128xf32>, vector<8x128xf32> -> vector<8x128xf32>
    %389 = arith.addf %387, %388 : vector<8x128xf32>
    %390 = vector.extract_strided_slice %389 {offsets = [0, 0], sizes = [8, 96], strides = [1, 1]} : vector<8x128xf32> to vector<8x96xf32>
    %391 = arith.negf %390 : vector<8x96xf32>
    %392 = math.exp %391 : vector<8x96xf32>
    %cst_160 = arith.constant 1.000000e+00 : f32
    %393 = vector.broadcast %cst_160 : f32 to vector<8x96xf32>
    %394 = arith.addf %393, %392 : vector<8x96xf32>
    %395 = arith.divf %393, %394 : vector<8x96xf32>
    %396 = vector.extract_strided_slice %395 {offsets = [0, 0], sizes = [8, 32], strides = [1, 1]} : vector<8x96xf32> to vector<8x32xf32>
    %397 = vector.extract_strided_slice %395 {offsets = [0, 32], sizes = [8, 32], strides = [1, 1]} : vector<8x96xf32> to vector<8x32xf32>
    %398 = vector.extract_strided_slice %395 {offsets = [0, 64], sizes = [8, 32], strides = [1, 1]} : vector<8x96xf32> to vector<8x32xf32>
    %399 = vector.extract_strided_slice %389 {offsets = [0, 96], sizes = [8, 32], strides = [1, 1]} : vector<8x128xf32> to vector<8x32xf32>
    %400 = math.tanh %399 : vector<8x32xf32>
    %401 = arith.mulf %397, %380 : vector<8x32xf32>
    %402 = arith.mulf %396, %400 : vector<8x32xf32>
    %403 = arith.addf %401, %402 : vector<8x32xf32>
    %404 = math.tanh %403 : vector<8x32xf32>
    %405 = arith.mulf %398, %404 : vector<8x32xf32>
    %c6_161 = arith.constant 6 : index
    %c0_162 = arith.constant 0 : index
    %c0_163 = arith.constant 0 : index
    %406 = vector.load %arg8[%c6_161, %c0_162, %c0_163] : memref<8x8x32xf32, #tpu.memory_space<vmem>>, vector<1x8x32xf32>
    %407 = vector.shape_cast %406 : vector<1x8x32xf32> to vector<8x32xf32>
    %408 = vector.shape_cast %405 : vector<8x32xf32> to vector<1x8x32xf32>
    tpu.vector_store %arg8[%c6_161, %c0_162, %c0_163], %408 {strides = array<i32>} : memref<8x8x32xf32, #tpu.memory_space<vmem>>, vector<1x8x32xf32>,
    %c7_164 = arith.constant 7 : index
    %c0_165 = arith.constant 0 : index
    %c0_166 = arith.constant 0 : index
    %409 = vector.load %arg7[%c7_164, %c0_165, %c0_166] : memref<8x8x128xf32, #tpu.memory_space<vmem>>, vector<1x8x128xf32>
    %410 = vector.shape_cast %409 : vector<1x8x128xf32> to vector<8x128xf32>
    %cst_167 = arith.constant dense<0.000000e+00> : vector<8x128xf32>
    %411 = tpu.matmul %405, %241, %cst_167 {dimension_numbers = #tpu.dot_dimension_numbers<[1], [0], [0], [1], [0, 0, 1, 1], [], []>} : vector<8x32xf32>, vector<32x128xf32>, vector<8x128xf32> -> vector<8x128xf32>
    %412 = arith.addf %410, %411 : vector<8x128xf32>
    %413 = vector.extract_strided_slice %412 {offsets = [0, 0], sizes = [8, 96], strides = [1, 1]} : vector<8x128xf32> to vector<8x96xf32>
    %414 = arith.negf %413 : vector<8x96xf32>
    %415 = math.exp %414 : vector<8x96xf32>
    %cst_168 = arith.constant 1.000000e+00 : f32
    %416 = vector.broadcast %cst_168 : f32 to vector<8x96xf32>
    %417 = arith.addf %416, %415 : vector<8x96xf32>
    %418 = arith.divf %416, %417 : vector<8x96xf32>
    %419 = vector.extract_strided_slice %418 {offsets = [0, 0], sizes = [8, 32], strides = [1, 1]} : vector<8x96xf32> to vector<8x32xf32>
    %420 = vector.extract_strided_slice %418 {offsets = [0, 32], sizes = [8, 32], strides = [1, 1]} : vector<8x96xf32> to vector<8x32xf32>
    %421 = vector.extract_strided_slice %418 {offsets = [0, 64], sizes = [8, 32], strides = [1, 1]} : vector<8x96xf32> to vector<8x32xf32>
    %422 = vector.extract_strided_slice %412 {offsets = [0, 96], sizes = [8, 32], strides = [1, 1]} : vector<8x128xf32> to vector<8x32xf32>
    %423 = math.tanh %422 : vector<8x32xf32>
    %424 = arith.mulf %420, %403 : vector<8x32xf32>
    %425 = arith.mulf %419, %423 : vector<8x32xf32>
    %426 = arith.addf %424, %425 : vector<8x32xf32>
    %427 = math.tanh %426 : vector<8x32xf32>
    %428 = arith.mulf %421, %427 : vector<8x32xf32>
    %c7_169 = arith.constant 7 : index
    %c0_170 = arith.constant 0 : index
    %c0_171 = arith.constant 0 : index
    %429 = vector.load %arg8[%c7_169, %c0_170, %c0_171] : memref<8x8x32xf32, #tpu.memory_space<vmem>>, vector<1x8x32xf32>
    %430 = vector.shape_cast %429 : vector<1x8x32xf32> to vector<8x32xf32>
    %431 = vector.shape_cast %428 : vector<8x32xf32> to vector<1x8x32xf32>
    tpu.vector_store %arg8[%c7_169, %c0_170, %c0_171], %431 {strides = array<i32>} : memref<8x8x32xf32, #tpu.memory_space<vmem>>, vector<1x8x32xf32>,
    %432 = vector.extract_strided_slice %428 {offsets = [0, 0], sizes = [2, 32], strides = [1, 1]} : vector<8x32xf32> to vector<2x32xf32>
    %c1_172 = arith.constant 1 : index
    %c0_173 = arith.constant 0 : index
    %c0_174 = arith.constant 0 : index
    %433 = vector.load %arg5[%c1_172, %c0_173, %c0_174] : memref<2x2x32xf32, #tpu.memory_space<vmem>>, vector<1x2x32xf32>
    %434 = vector.shape_cast %433 : vector<1x2x32xf32> to vector<2x32xf32>
    %435 = vector.shape_cast %432 : vector<2x32xf32> to vector<1x2x32xf32>
    tpu.vector_store %arg5[%c1_172, %c0_173, %c0_174], %435 {strides = array<i32>} : memref<2x2x32xf32, #tpu.memory_space<vmem>>, vector<1x2x32xf32>,
    %436 = vector.extract_strided_slice %426 {offsets = [0, 0], sizes = [2, 32], strides = [1, 1]} : vector<8x32xf32> to vector<2x32xf32>
    %c1_175 = arith.constant 1 : index
    %c0_176 = arith.constant 0 : index
    %c0_177 = arith.constant 0 : index
    %437 = vector.load %arg6[%c1_175, %c0_176, %c0_177] : memref<2x2x32xf32, #tpu.memory_space<vmem>>, vector<1x2x32xf32>
    %438 = vector.shape_cast %437 : vector<1x2x32xf32> to vector<2x32xf32>
    %439 = vector.shape_cast %436 : vector<2x32xf32> to vector<1x2x32xf32>
    tpu.vector_store %arg6[%c1_175, %c0_176, %c0_177], %439 {strides = array<i32>} : memref<2x2x32xf32, #tpu.memory_space<vmem>>, vector<1x2x32xf32>,
    %c64 = arith.constant 64 : index
    %c0_178 = arith.constant 0 : index
    %440 = vector.load %arg0[%c64, %c0_178] : memref<336x128xf32, #tpu.memory_space<vmem>>, vector<16x128xf32>
    %441 = vector.extract_strided_slice %440 {offsets = [0, 0], sizes = [16, 64], strides = [1, 1]} : vector<16x128xf32> to vector<16x64xf32>
    %c0_179 = arith.constant 0 : index
    %c0_180 = arith.constant 0 : index
    %c0_181 = arith.constant 0 : index
    %442 = vector.load %arg8[%c0_179, %c0_180, %c0_181] : memref<8x8x32xf32, #tpu.memory_space<vmem>>, vector<8x8x32xf32>
    %443 = vector.shape_cast %442 : vector<8x8x32xf32> to vector<64x32xf32>
    %cst_182 = arith.constant dense<0.000000e+00> : vector<16x32xf32>
    %444 = tpu.matmul %441, %443, %cst_182 {dimension_numbers = #tpu.dot_dimension_numbers<[1], [0], [0], [1], [0, 0, 1, 1], [], []>} : vector<16x64xf32>, vector<64x32xf32>, vector<16x32xf32> -> vector<16x32xf32>
    %c296 = arith.constant 296 : index
    %c0_183 = arith.constant 0 : index
    %445 = vector.load %arg0[%c296, %c0_183] : memref<336x128xf32, #tpu.memory_space<vmem>>, vector<32x128xf32>
    %cst_184 = arith.constant dense<0.000000e+00> : vector<16x128xf32>
    %446 = tpu.matmul %444, %445, %cst_184 {dimension_numbers = #tpu.dot_dimension_numbers<[1], [0], [0], [1], [0, 0, 1, 1], [], []>} : vector<16x32xf32>, vector<32x128xf32>, vector<16x128xf32> -> vector<16x128xf32>
    %c328 = arith.constant 328 : index
    %c0_185 = arith.constant 0 : index
    %447 = vector.load %arg0[%c328, %c0_185] : memref<336x128xf32, #tpu.memory_space<vmem>>, vector<8x128xf32>
    %448 = vector.extract_strided_slice %447 {offsets = [0, 0], sizes = [1, 128], strides = [1, 1]} : vector<8x128xf32> to vector<1x128xf32>
    %449 = vector.broadcast %448 : vector<1x128xf32> to vector<16x128xf32>
    %450 = arith.addf %446, %449 : vector<16x128xf32>
    %c0_186 = arith.constant 0 : index
    %c0_187 = arith.constant 0 : index
    %451 = vector.load %arg4[%c0_186, %c0_187] : memref<16x128xf32, #tpu.memory_space<vmem>>, vector<16x128xf32>
    tpu.vector_store %arg4[%c0_186, %c0_187], %450 {strides = array<i32>} : memref<16x128xf32, #tpu.memory_space<vmem>>, vector<16x128xf32>,
    return
  }
}

</mosaic_0001>

<llo_original>
// kernel: forward.1
$region0: #{forward.1}
  #allocation0 [shape = 'u32[]', space=smem, size = 0x4, offset = 0x4, fixed_abs, tag = 'smem constant byte address 0x4 - core index']
  #allocation1 [shape = 'u32[72,128]{1,0:T(1,128)}', space=vmem, size = 0x9000, scoped, tag = 'internal scratch']
  #allocation2 [shape = 'f32[8,8,128]{2,1,0:T(8,128)}', space=vmem, size = 0x8000, scoped, tag = 'scratch operand']
  #allocation3 [shape = 'f32[8,8,32]{2,1,0:T(8,128)}', space=vmem, size = 0x8000, scoped, tag = 'scratch operand']
  %s0 = inlined_call_operand.hbm [shape: f32[336,128], index: 0, kind: input, shape index: {}]
  %s1 = inlined_call_operand.hbm [shape: f32[16,10], index: 1, kind: input, shape index: {}]
  %s2 = inlined_call_operand.hbm [shape: f32[2,2,32], index: 2, kind: input, shape index: {}]
  %s3 = inlined_call_operand.hbm [shape: f32[2,2,32], index: 3, kind: input, shape index: {}]
  %s4 = inlined_call_operand.vmem [shape: f32[16,128], index: 4, kind: output, shape index: {0}]
  %s5 = inlined_call_operand.hbm [shape: f32[2,2,32], index: 5, kind: output, shape index: {1}]
  %s6 = inlined_call_operand.hbm [shape: f32[2,2,32], index: 6, kind: output, shape index: {2}]
  %7 = xla_tuple %s4, %s5, %s6
  %s8 = sld [smem:[#allocation0]]
  $region58: #{forward.1} parent=0
    _
  %s10 = ssub.s32 1, %s8
  %s11 = scalar_select 0, %s10, %s8
  $region1: #{forward.1} parent=0
    #allocation4 [shape = 'u8[172032]{0}', space=vmem, size = 0x2a000, scoped, tag = 'input window, operand 0, single buffered']
    #allocation5 [shape = 's32[1]{0}', space=sflag, size = 0x4, scoped, tag = 'scoped memory for forward.1']
    #allocation6 [shape = 's32[1]{0}', space=sflag, size = 0x4, scoped, tag = 'scoped memory for forward.1']
    #allocation7 [shape = 'u8[8192]{0}', space=vmem, size = 0x2000, scoped, tag = 'input window, operand 1, single buffered']
    #allocation8 [shape = 's32[1]{0}', space=sflag, size = 0x4, scoped, tag = 'scoped memory for forward.1']
    #allocation9 [shape = 'u8[2048]{0}', space=vmem, size = 0x800, scoped, tag = 'input window, operand 2, single buffered']
    #allocation10 [shape = 'u8[2048]{0}', space=vmem, size = 0x800, scoped, tag = 'input window, operand 3, single buffered']
    #allocation11 [shape = 's32[1]{0}', space=sflag, size = 0x4, scoped, tag = 'scoped memory for forward.1']
    #allocation12 [shape = 'u8[2048]{0}', space=vmem, size = 0x800, scoped, tag = 'output window, operand 1, single buffered']
    #allocation13 [shape = 'u8[2048]{0}', space=vmem, size = 0x800, scoped, tag = 'output window, operand 2, single buffered']
    #allocation14 [shape = 's32[1]{0}', space=sflag, size = 0x4, scoped, tag = 'scoped memory for forward.1']
    %12 = vsyncpa [#allocation5], 0
    %13 = vsyncpa [#allocation8], 0
    %14 = vsyncpa [#allocation11], 0
    %15 = vsyncpa [#allocation6], 0
    %16 = vsyncpa [#allocation14], 0
    // Predicated region
    $region2: #{forward.1} parent=1 // pred_check
      _
    $region3: #{forward.1} parent=1 // pred_check_branch
      %18 = sbr.rel (0) target = $region5
    $region4: #{forward.1} parent=1 // pred_region
      %20 = vsyncadd [#allocation5], 0
      %s21 = sshll.u32 %s0, 4
      %s22 = int_to_ptr.hbm [resolvable:$true] %s21
      %s23 = sshll.u32 [#allocation4], 4
      %s24 = int_to_ptr.vmem [resolvable:$true] %s23
      %29 = dma.hbm_to_vmem [thread:$0]  %s22, 5376, %s24, [#allocation5], 128, 128, 8
    $region5: #{forward.1} parent=1 // pred_fallthru
      _
    // Predicated region
    $region6: #{forward.1} parent=1 // pred_check
      _
    $region7: #{forward.1} parent=1 // pred_check_branch
      %31 = sbr.rel (0) target = $region9
    $region8: #{forward.1} parent=1 // pred_region
      %33 = vsyncadd [#allocation8], 0
      %s34 = sshll.u32 %s1, 4
      %s35 = int_to_ptr.hbm [resolvable:$true] %s34
      %s36 = sshll.u32 [#allocation7], 4
      %s37 = int_to_ptr.vmem [resolvable:$true] %s36
      %42 = dma.hbm_to_vmem [thread:$0]  %s35, 256, %s37, [#allocation8], 128, 128, 8
    $region9: #{forward.1} parent=1 // pred_fallthru
      _
    // Predicated region
    $region10: #{forward.1} parent=1 // pred_check
      _
    $region11: #{forward.1} parent=1 // pred_check_branch
      %44 = sbr.rel (0) target = $region13
    $region12: #{forward.1} parent=1 // pred_region
      %46 = vsyncadd [#allocation8], 0
      %s47 = sshll.u32 %s2, 4
      %s48 = int_to_ptr.hbm [resolvable:$true] %s47
      %s49 = sshll.u32 [#allocation9], 4
      %s50 = int_to_ptr.vmem [resolvable:$true] %s49
      %55 = dma.hbm_to_vmem [thread:$0]  %s48, 64, %s50, [#allocation8], 32, 32, 2
    $region13: #{forward.1} parent=1 // pred_fallthru
      _
    // Predicated region
    $region14: #{forward.1} parent=1 // pred_check
      _
    $region15: #{forward.1} parent=1 // pred_check_branch
      %57 = sbr.rel (0) target = $region17
    $region16: #{forward.1} parent=1 // pred_region
      %59 = vsyncadd [#allocation11], 0
      %s60 = sshll.u32 %s3, 4
      %s61 = int_to_ptr.hbm [resolvable:$true] %s60
      %s62 = sshll.u32 [#allocation10], 4
      %s63 = int_to_ptr.vmem [resolvable:$true] %s62
      %68 = dma.hbm_to_vmem [thread:$0]  %s61, 64, %s63, [#allocation11], 32, 32, 2
    $region17: #{forward.1} parent=1 // pred_fallthru
      _
    // Predicated region
    $region18: #{forward.1} parent=1 // pred_check
      _
    $region19: #{forward.1} parent=1 // pred_check_branch
      %70 = sbr.rel (0) target = $region21
    $region20: #{forward.1} parent=1 // pred_region
      %72 = dma.done [#allocation5], 5376
    $region21: #{forward.1} parent=1 // pred_fallthru
      _
    // Predicated region
    $region22: #{forward.1} parent=1 // pred_check
      _
    $region23: #{forward.1} parent=1 // pred_check_branch
      %74 = sbr.rel (0) target = $region25
    $region24: #{forward.1} parent=1 // pred_region
      %76 = dma.done [#allocation8], 256
    $region25: #{forward.1} parent=1 // pred_fallthru
      _
    // Predicated region
    $region26: #{forward.1} parent=1 // pred_check
      _
    $region27: #{forward.1} parent=1 // pred_check_branch
      %78 = sbr.rel (0) target = $region29
    $region28: #{forward.1} parent=1 // pred_region
      %80 = dma.done [#allocation8], 64
    $region29: #{forward.1} parent=1 // pred_fallthru
      _
    // Predicated region
    $region30: #{forward.1} parent=1 // pred_check
      _
    $region31: #{forward.1} parent=1 // pred_check_branch
      %82 = sbr.rel (0) target = $region33
    $region32: #{forward.1} parent=1 // pred_region
      %84 = dma.done [#allocation11], 64
    $region33: #{forward.1} parent=1 // pred_fallthru
      _
    %v85 = vld [vmem:[#allocation7] sm:$0xff]
    %v86 = vld [vmem:[#allocation7 + $0x8] sm:$0xff]
    %v87 = vld [vmem:[#allocation4 + $0x58] sm:$0xff]
    %v88 = vld [vmem:[#allocation4 + $0x60] sm:$0xff]
    %v89 = vld [vmem:[#allocation4 + $0x68] sm:$0xff]
    %v90 = vperm.slane %v89, 0
    %vm91 = vcmask 80896
    %v93 = vsel %vm91, %v85, 0
    %v96 = vsel %vm91, %v86, 0
    %vm98 = vcmask 1041408
    %v100 = vsel %vm98, %v88, 0
    %102 = vmatpush.msra.mxu0 0.0
    %103 = vmatpush.msra.mxu0 0.0
    %104 = vmatpush.msra.mxu0 0.0
    %105 = vmatpush.msra.mxu0 0.0
    %106 = vmatpush.msra.mxu0 0.0
    %107 = vmatpush.msra.mxu0 0.0
    %108 = vmatpush.msra.mxu0 0.0
    %109 = vmatpush.msra.mxu0 0.0
    %110 = vmatpush.msra.mxu0 0.0
    %111 = vmatpush.msra.mxu0 0.0
    %112 = vmatpush.msra.mxu0 0.0
    %113 = vmatpush.msra.mxu0 0.0
    %114 = vmatpush.msra.mxu0 0.0
    %115 = vmatpush.msra.mxu0 0.0
    %116 = vmatpush.msra.mxu0 %v100
    %117 = vmatpush.msra.mxu0 %v87
    %118 = vmatmul.f32.gmra.mxu0 %v93
    %v119 = vpop.f32.mrf.mxu0
    %v120 = vadd.f32 %v90, %v119
    %121 = vmatmul.f32.gmra.mxu0 %v96
    %v122 = vpop.f32.mrf.mxu0
    %v123 = vadd.f32 %v90, %v122
    %124 = vdwg.mxu0
    %v125 = vmax.f32 %v120, 0.0
    %v126 = vmax.f32 %v123, 0.0
    %v127 = vld [vmem:[#allocation4 + $0x70] sm:$0xff]
    %v128 = vld [vmem:[#allocation4 + $0x78] sm:$0xff]
    %v129 = vld [vmem:[#allocation4 + $0x80] sm:$0xff]
    %v130 = vld [vmem:[#allocation4 + $0x88] sm:$0xff]
    %v131 = vld [vmem:[#allocation4 + $0x90] sm:$0xff]
    %v132 = vperm.slane %v131, 0
    %vm133 = vcmask 261120
    %v135 = vsel %vm133, %v125, 0
    %v138 = vsel %vm133, %v126, 0
    %140 = vmatpush.msra.mxu0 0.0
    %141 = vmatpush.msra.mxu0 0.0
    %142 = vmatpush.msra.mxu0 0.0
    %143 = vmatpush.msra.mxu0 0.0
    %144 = vmatpush.msra.mxu0 0.0
    %145 = vmatpush.msra.mxu0 0.0
    %146 = vmatpush.msra.mxu0 0.0
    %147 = vmatpush.msra.mxu0 0.0
    %148 = vmatpush.msra.mxu0 0.0
    %149 = vmatpush.msra.mxu0 0.0
    %150 = vmatpush.msra.mxu0 0.0
    %151 = vmatpush.msra.mxu0 0.0
    %152 = vmatpush.msra.mxu0 %v130
    %153 = vmatpush.msra.mxu0 %v129
    %154 = vmatpush.msra.mxu0 %v128
    %155 = vmatpush.msra.mxu0 %v127
    %156 = vmatmul.f32.gmra.mxu0 %v135
    %v157 = vpop.f32.mrf.mxu0
    %v158 = vadd.f32 %v132, %v157
    %159 = vmatmul.f32.gmra.mxu0 %v138
    %v160 = vpop.f32.mrf.mxu0
    %v161 = vadd.f32 %v132, %v160
    %162 = vdwg.mxu0
    %v163 = vmax.f32 %v158, 0.0
    %v164 = vmax.f32 %v161, 0.0
    %v165 = vld [vmem:[#allocation4] sm:$0xff]
    %v166 = vld [vmem:[#allocation4 + $0x8] sm:$0xff]
    %v167 = vld [vmem:[#allocation4 + $0x10] sm:$0xff]
    %v168 = vld [vmem:[#allocation4 + $0x18] sm:$0xff]
    %v169 = vld [vmem:[#allocation4 + $0x20] sm:$0xff]
    %v170 = vld [vmem:[#allocation4 + $0x28] sm:$0xff]
    %v171 = vld [vmem:[#allocation4 + $0x30] sm:$0xff]
    %v172 = vld [vmem:[#allocation4 + $0x38] sm:$0xff]
    %vm173 = vcmask 130048
    %v175 = vsel %vm173, %v165, 0
    %v178 = vsel %vm173, %v166, 0
    %v181 = vsel %vm173, %v167, 0
    %v184 = vsel %vm173, %v168, 0
    %v187 = vsel %vm173, %v169, 0
    %v190 = vsel %vm173, %v170, 0
    %v193 = vsel %vm173, %v171, 0
    %v196 = vsel %vm173, %v172, 0
    %198 = vmatpush.msra.mxu0 0.0
    %199 = vmatpush.msra.mxu0 0.0
    %200 = vmatpush.msra.mxu0 0.0
    %201 = vmatpush.msra.mxu0 0.0
    %202 = vmatpush.msra.mxu0 0.0
    %203 = vmatpush.msra.mxu0 0.0
    %204 = vmatpush.msra.mxu0 0.0
    %205 = vmatpush.msra.mxu0 0.0
    %206 = vmatpush.msra.mxu0 0.0
    %207 = vmatpush.msra.mxu0 0.0
    %208 = vmatpush.msra.mxu0 0.0
    %209 = vmatpush.msra.mxu0 0.0
    %210 = vmatpush.msra.mxu0 0.0
    %211 = vmatpush.msra.mxu0 0.0
    %212 = vmatpush.msra.mxu0 %v164
    %213 = vmatpush.msra.mxu0 %v163
    %214 = vmatmul.f32.gmra.mxu0 %v175
    %v215 = vpop.f32.mrf.mxu0
    %v216 = vadd.f32 0.0, %v215
    %217 = vmatmul.f32.gmra.mxu0 %v178
    %v218 = vpop.f32.mrf.mxu0
    %v219 = vadd.f32 0.0, %v218
    %220 = vmatmul.f32.gmra.mxu0 %v181
    %v221 = vpop.f32.mrf.mxu0
    %v222 = vadd.f32 0.0, %v221
    %223 = vmatmul.f32.gmra.mxu0 %v184
    %v224 = vpop.f32.mrf.mxu0
    %v225 = vadd.f32 0.0, %v224
    %226 = vmatmul.f32.gmra.mxu0 %v187
    %v227 = vpop.f32.mrf.mxu0
    %v228 = vadd.f32 0.0, %v227
    %229 = vmatmul.f32.gmra.mxu0 %v190
    %v230 = vpop.f32.mrf.mxu0
    %v231 = vadd.f32 0.0, %v230
    %232 = vmatmul.f32.gmra.mxu0 %v193
    %v233 = vpop.f32.mrf.mxu0
    %v234 = vadd.f32 0.0, %v233
    %235 = vmatmul.f32.gmra.mxu0 %v196
    %v236 = vpop.f32.mrf.mxu0
    %v237 = vadd.f32 0.0, %v236
    %238 = vdwg.mxu0
    %v239 = vld [vmem:[#allocation4 + $0x50] sm:$0xff]
    %v240 = vld [vmem:[#allocation4 + $0x98] sm:$0xff]
    %v241 = vld [vmem:[#allocation4 + $0xa0] sm:$0xff]
    %v242 = vld [vmem:[#allocation4 + $0xa8] sm:$0xff]
    %v243 = vld [vmem:[#allocation4 + $0xb0] sm:$0xff]
    %v244 = vld [vmem:[#allocation4 + $0xd8] sm:$0xff]
    %v245 = vperm.slane %v244, 0
    %v247 = vsel %vm133, %v216, 0
    %v250 = vsel %vm133, %v219, 0
    %v253 = vsel %vm133, %v222, 0
    %v256 = vsel %vm133, %v225, 0
    %v259 = vsel %vm133, %v228, 0
    %v262 = vsel %vm133, %v231, 0
    %v265 = vsel %vm133, %v234, 0
    %v268 = vsel %vm133, %v237, 0
    %270 = vmatpush.msra.mxu0 0.0
    %271 = vmatpush.msra.mxu0 0.0
    %272 = vmatpush.msra.mxu0 0.0
    %273 = vmatpush.msra.mxu0 0.0
    %274 = vmatpush.msra.mxu0 0.0
    %275 = vmatpush.msra.mxu0 0.0
    %276 = vmatpush.msra.mxu0 0.0
    %277 = vmatpush.msra.mxu0 0.0
    %278 = vmatpush.msra.mxu0 0.0
    %279 = vmatpush.msra.mxu0 0.0
    %280 = vmatpush.msra.mxu0 0.0
    %281 = vmatpush.msra.mxu0 0.0
    %282 = vmatpush.msra.mxu0 %v243
    %283 = vmatpush.msra.mxu0 %v242
    %284 = vmatpush.msra.mxu0 %v241
    %285 = vmatpush.msra.mxu0 %v240
    %286 = vmatmul.f32.gmra.mxu0 %v247
    %v287 = vpop.f32.mrf.mxu0
    %v288 = vadd.f32 %v245, %v287
    %289 = vmatmul.f32.gmra.mxu0 %v250
    %v290 = vpop.f32.mrf.mxu0
    %v291 = vadd.f32 %v245, %v290
    %292 = vmatmul.f32.gmra.mxu0 %v253
    %v293 = vpop.f32.mrf.mxu0
    %v294 = vadd.f32 %v245, %v293
    %295 = vmatmul.f32.gmra.mxu0 %v256
    %v296 = vpop.f32.mrf.mxu0
    %v297 = vadd.f32 %v245, %v296
    %298 = vmatmul.f32.gmra.mxu0 %v259
    %v299 = vpop.f32.mrf.mxu0
    %v300 = vadd.f32 %v245, %v299
    %301 = vmatmul.f32.gmra.mxu0 %v262
    %v302 = vpop.f32.mrf.mxu0
    %v303 = vadd.f32 %v245, %v302
    %304 = vmatmul.f32.gmra.mxu0 %v265
    %v305 = vpop.f32.mrf.mxu0
    %v306 = vadd.f32 %v245, %v305
    %307 = vmatmul.f32.gmra.mxu0 %v268
    %v308 = vpop.f32.mrf.mxu0
    %v309 = vadd.f32 %v245, %v308
    %310 = vdwg.mxu0
    %311 = vst [vmem:[#allocation2] sm:$0xff] %v288
    %312 = vst [vmem:[#allocation2 + $0x8] sm:$0xff] %v291
    %313 = vst [vmem:[#allocation2 + $0x10] sm:$0xff] %v294
    %314 = vst [vmem:[#allocation2 + $0x18] sm:$0xff] %v297
    %315 = vst [vmem:[#allocation2 + $0x20] sm:$0xff] %v300
    %316 = vst [vmem:[#allocation2 + $0x28] sm:$0xff] %v303
    %317 = vst [vmem:[#allocation2 + $0x30] sm:$0xff] %v306
    %318 = vst [vmem:[#allocation2 + $0x38] sm:$0xff] %v309
    %v319 = vld [vmem:[#allocation4 + $0xb8] sm:$0xff]
    %v320 = vld [vmem:[#allocation4 + $0xc0] sm:$0xff]
    %v321 = vld [vmem:[#allocation4 + $0xc8] sm:$0xff]
    %v322 = vld [vmem:[#allocation4 + $0xd0] sm:$0xff]
    %v323 = vld [vmem:[#allocation9] sm:$0x3]
    %vm324 = vcmask 15360
    %v326 = vsel %vm324, %v239, 0
    %v329 = vsel %vm98, %v323, 0
    %331 = vmatpush.msra.mxu0 0.0
    %332 = vmatpush.msra.mxu0 0.0
    %333 = vmatpush.msra.mxu0 0.0
    %334 = vmatpush.msra.mxu0 0.0
    %335 = vmatpush.msra.mxu0 0.0
    %336 = vmatpush.msra.mxu0 0.0
    %337 = vmatpush.msra.mxu0 0.0
    %338 = vmatpush.msra.mxu0 0.0
    %339 = vmatpush.msra.mxu0 0.0
    %340 = vmatpush.msra.mxu0 0.0
    %341 = vmatpush.msra.mxu0 0.0
    %342 = vmatpush.msra.mxu0 0.0
    %343 = vmatpush.msra.mxu0 0.0
    %344 = vmatpush.msra.mxu0 0.0
    %345 = vmatpush.msra.mxu0 0.0
    %346 = vmatpush.msra.mxu0 %v329
    %347 = vmatmul.f32.gmra.mxu0 %v326
    %v348 = vpop.f32.mrf.mxu0
    %v349 = vadd.f32 0.0, %v348
    %350 = vdwg.mxu0
    %v351 = vld [vmem:[#allocation10] sm:$0x3]
    %v353 = vsel %vm98, %v351, 0
    %355 = vmatpush.msra.mxu0 0.0
    %356 = vmatpush.msra.mxu0 0.0
    %357 = vmatpush.msra.mxu0 0.0
    %358 = vmatpush.msra.mxu0 0.0
    %359 = vmatpush.msra.mxu0 0.0
    %360 = vmatpush.msra.mxu0 0.0
    %361 = vmatpush.msra.mxu0 0.0
    %362 = vmatpush.msra.mxu0 0.0
    %363 = vmatpush.msra.mxu0 0.0
    %364 = vmatpush.msra.mxu0 0.0
    %365 = vmatpush.msra.mxu0 0.0
    %366 = vmatpush.msra.mxu0 0.0
    %367 = vmatpush.msra.mxu0 0.0
    %368 = vmatpush.msra.mxu0 0.0
    %369 = vmatpush.msra.mxu0 0.0
    %370 = vmatpush.msra.mxu0 %v353
    %371 = vmatmul.f32.gmra.mxu0 %v326
    %v372 = vpop.f32.mrf.mxu0
    %v373 = vadd.f32 0.0, %v372
    %374 = vdwg.mxu0
    %v375 = vld [vmem:[#allocation2] sm:$0xff]
    %v377 = vsel %vm133, %v349, 0
    %379 = vmatpush.msra.mxu0 0.0
    %380 = vmatpush.msra.mxu0 0.0
    %381 = vmatpush.msra.mxu0 0.0
    %382 = vmatpush.msra.mxu0 0.0
    %383 = vmatpush.msra.mxu0 0.0
    %384 = vmatpush.msra.mxu0 0.0
    %385 = vmatpush.msra.mxu0 0.0
    %386 = vmatpush.msra.mxu0 0.0
    %387 = vmatpush.msra.mxu0 0.0
    %388 = vmatpush.msra.mxu0 0.0
    %389 = vmatpush.msra.mxu0 0.0
    %390 = vmatpush.msra.mxu0 0.0
    %391 = vmatpush.msra.mxu0 %v322
    %392 = vmatpush.msra.mxu0 %v321
    %393 = vmatpush.msra.mxu0 %v320
    %394 = vmatpush.msra.mxu0 %v319
    %395 = vmatmul.f32.gmra.mxu0 %v377
    %v396 = vpop.f32.mrf.mxu0
    %v397 = vadd.f32 0.0, %v396
    %398 = vdwg.mxu0
    %v399 = vadd.f32 %v375, %v397
    %v400 = vxor.u32 %v399, 2147483648
    %v401 = vmul.f32 %v400, 1.442695
    %v402 = vpow.pop %v401
    %v403 = vadd.f32 %v402, 1.0
    %v404 = vrcp.pop %v403
    %v405 = vmul.f32 %v403, %v404
    %v406 = vsub.f32 1.0, %v405
    %v407 = vmul.f32 %v404, %v406
    %v408 = vadd.f32 %v404, %v407
    %vm409 = vweird.f32 %v403
    %vm410 = vweird.f32 %v404
    %vm411 = vmor %vm409, %vm410
    %v412 = vsel %vm411, %v404, %v408
    %v413 = vand.u32 2147483647, %v403
    %vm414 = vcmp.eq.f32.partialorder %v413, 8.507059e+37
    %v415 = vand.u32 %v403, 2147483648
    %v416 = vor.u32 1.1754944e-38, %v415
    %v417 = vsel %vm414, %v416, %v412
    %v418 = vmul.f32 1.0, %v417
    %v419 = vtanh.pop %v399
    %421 = vrot.lane.b32.xlu0 %v373, 32
    %v422 = vpop.permute.xlu0 %421
    %v424 = vmul.f32 %v418, %v422
    %426 = vrot.lane.b32.xlu0 %v419, 32
    %v427 = vpop.permute.xlu0 %426
    %v429 = vmul.f32 %v418, %v427
    %431 = vrot.lane.b32.xlu0 %v429, 32
    %v432 = vpop.permute.xlu0 %431
    %v434 = vadd.f32 %v424, %v432
    %v435 = vtanh.pop %v434
    %437 = vrot.lane.b32.xlu0 %v435, 32
    %v438 = vpop.permute.xlu0 %437
    %v440 = vmul.f32 %v418, %v438
    %442 = vrot.lane.b32.xlu0 %v440, 64
    %v443 = vpop.permute.xlu0 %442
    %445 = vst.msk [vmem:[#allocation3] sm:$0xff] %vm133, %v443
    %s446 = scalar_lea.vmem [#allocation2], 8
    %v447 = vld [vmem:[%s446] sm:$0xff]
    %v448 = vsel %vm133, %v443, 0
    %450 = vmatpush.msra.mxu0 0.0
    %451 = vmatpush.msra.mxu0 0.0
    %452 = vmatpush.msra.mxu0 0.0
    %453 = vmatpush.msra.mxu0 0.0
    %454 = vmatpush.msra.mxu0 0.0
    %455 = vmatpush.msra.mxu0 0.0
    %456 = vmatpush.msra.mxu0 0.0
    %457 = vmatpush.msra.mxu0 0.0
    %458 = vmatpush.msra.mxu0 0.0
    %459 = vmatpush.msra.mxu0 0.0
    %460 = vmatpush.msra.mxu0 0.0
    %461 = vmatpush.msra.mxu0 0.0
    %462 = vmatpush.msra.mxu0 %v322
    %463 = vmatpush.msra.mxu0 %v321
    %464 = vmatpush.msra.mxu0 %v320
    %465 = vmatpush.msra.mxu0 %v319
    %466 = vmatmul.f32.gmra.mxu0 %v448
    %v467 = vpop.f32.mrf.mxu0
    %v468 = vadd.f32 0.0, %v467
    %469 = vdwg.mxu0
    %v470 = vadd.f32 %v447, %v468
    %v471 = vxor.u32 %v470, 2147483648
    %v472 = vmul.f32 %v471, 1.442695
    %v473 = vpow.pop %v472
    %v474 = vadd.f32 %v473, 1.0
    %v475 = vrcp.pop %v474
    %v476 = vmul.f32 %v474, %v475
    %v477 = vsub.f32 1.0, %v476
    %v478 = vmul.f32 %v475, %v477
    %v479 = vadd.f32 %v475, %v478
    %vm480 = vweird.f32 %v474
    %vm481 = vweird.f32 %v475
    %vm482 = vmor %vm480, %vm481
    %v483 = vsel %vm482, %v475, %v479
    %v484 = vand.u32 2147483647, %v474
    %vm485 = vcmp.eq.f32.partialorder %v484, 8.507059e+37
    %v486 = vand.u32 %v474, 2147483648
    %v487 = vor.u32 1.1754944e-38, %v486
    %v488 = vsel %vm485, %v487, %v483
    %v489 = vmul.f32 1.0, %v488
    %v490 = vtanh.pop %v470
    %v491 = vmul.f32 %v489, %v434
    %493 = vrot.lane.b32.xlu0 %v490, 32
    %v494 = vpop.permute.xlu0 %493
    %v496 = vmul.f32 %v489, %v494
    %498 = vrot.lane.b32.xlu0 %v496, 32
    %v499 = vpop.permute.xlu0 %498
    %v501 = vadd.f32 %v491, %v499
    %v502 = vtanh.pop %v501
    %504 = vrot.lane.b32.xlu0 %v502, 32
    %v505 = vpop.permute.xlu0 %504
    %v507 = vmul.f32 %v489, %v505
    %509 = vrot.lane.b32.xlu0 %v507, 64
    %v510 = vpop.permute.xlu0 %509
    %s512 = scalar_lea.vmem [#allocation3], 8
    %513 = vst.msk [vmem:[%s512] sm:$0xff] %vm133, %v510
    %s514 = scalar_lea.vmem [#allocation2], 16
    %v515 = vld [vmem:[%s514] sm:$0xff]
    %v516 = vsel %vm133, %v510, 0
    %518 = vmatpush.msra.mxu0 0.0
    %519 = vmatpush.msra.mxu0 0.0
    %520 = vmatpush.msra.mxu0 0.0
    %521 = vmatpush.msra.mxu0 0.0
    %522 = vmatpush.msra.mxu0 0.0
    %523 = vmatpush.msra.mxu0 0.0
    %524 = vmatpush.msra.mxu0 0.0
    %525 = vmatpush.msra.mxu0 0.0
    %526 = vmatpush.msra.mxu0 0.0
    %527 = vmatpush.msra.mxu0 0.0
    %528 = vmatpush.msra.mxu0 0.0
    %529 = vmatpush.msra.mxu0 0.0
    %530 = vmatpush.msra.mxu0 %v322
    %531 = vmatpush.msra.mxu0 %v321
    %532 = vmatpush.msra.mxu0 %v320
    %533 = vmatpush.msra.mxu0 %v319
    %534 = vmatmul.f32.gmra.mxu0 %v516
    %v535 = vpop.f32.mrf.mxu0
    %v536 = vadd.f32 0.0, %v535
    %537 = vdwg.mxu0
    %v538 = vadd.f32 %v515, %v536
    %v539 = vxor.u32 %v538, 2147483648
    %v540 = vmul.f32 %v539, 1.442695
    %v541 = vpow.pop %v540
    %v542 = vadd.f32 %v541, 1.0
    %v543 = vrcp.pop %v542
    %v544 = vmul.f32 %v542, %v543
    %v545 = vsub.f32 1.0, %v544
    %v546 = vmul.f32 %v543, %v545
    %v547 = vadd.f32 %v543, %v546
    %vm548 = vweird.f32 %v542
    %vm549 = vweird.f32 %v543
    %vm550 = vmor %vm548, %vm549
    %v551 = vsel %vm550, %v543, %v547
    %v552 = vand.u32 2147483647, %v542
    %vm553 = vcmp.eq.f32.partialorder %v552, 8.507059e+37
    %v554 = vand.u32 %v542, 2147483648
    %v555 = vor.u32 1.1754944e-38, %v554
    %v556 = vsel %vm553, %v555, %v551
    %v557 = vmul.f32 1.0, %v556
    %v558 = vtanh.pop %v538
    %v559 = vmul.f32 %v557, %v501
    %561 = vrot.lane.b32.xlu0 %v558, 32
    %v562 = vpop.permute.xlu0 %561
    %v564 = vmul.f32 %v557, %v562
    %566 = vrot.lane.b32.xlu0 %v564, 32
    %v567 = vpop.permute.xlu0 %566
    %v569 = vadd.f32 %v559, %v567
    %v570 = vtanh.pop %v569
    %572 = vrot.lane.b32.xlu0 %v570, 32
    %v573 = vpop.permute.xlu0 %572
    %v575 = vmul.f32 %v557, %v573
    %577 = vrot.lane.b32.xlu0 %v575, 64
    %v578 = vpop.permute.xlu0 %577
    %s580 = scalar_lea.vmem [#allocation3], 16
    %581 = vst.msk [vmem:[%s580] sm:$0xff] %vm133, %v578
    %s582 = scalar_lea.vmem [#allocation2], 24
    %v583 = vld [vmem:[%s582] sm:$0xff]
    %v584 = vsel %vm133, %v578, 0
    %586 = vmatpush.msra.mxu0 0.0
    %587 = vmatpush.msra.mxu0 0.0
    %588 = vmatpush.msra.mxu0 0.0
    %589 = vmatpush.msra.mxu0 0.0
    %590 = vmatpush.msra.mxu0 0.0
    %591 = vmatpush.msra.mxu0 0.0
    %592 = vmatpush.msra.mxu0 0.0
    %593 = vmatpush.msra.mxu0 0.0
    %594 = vmatpush.msra.mxu0 0.0
    %595 = vmatpush.msra.mxu0 0.0
    %596 = vmatpush.msra.mxu0 0.0
    %597 = vmatpush.msra.mxu0 0.0
    %598 = vmatpush.msra.mxu0 %v322
    %599 = vmatpush.msra.mxu0 %v321
    %600 = vmatpush.msra.mxu0 %v320
    %601 = vmatpush.msra.mxu0 %v319
    %602 = vmatmul.f32.gmra.mxu0 %v584
    %v603 = vpop.f32.mrf.mxu0
    %v604 = vadd.f32 0.0, %v603
    %605 = vdwg.mxu0
    %v606 = vadd.f32 %v583, %v604
    %v607 = vxor.u32 %v606, 2147483648
    %v608 = vmul.f32 %v607, 1.442695
    %v609 = vpow.pop %v608
    %v610 = vadd.f32 %v609, 1.0
    %v611 = vrcp.pop %v610
    %v612 = vmul.f32 %v610, %v611
    %v613 = vsub.f32 1.0, %v612
    %v614 = vmul.f32 %v611, %v613
    %v615 = vadd.f32 %v611, %v614
    %vm616 = vweird.f32 %v610
    %vm617 = vweird.f32 %v611
    %vm618 = vmor %vm616, %vm617
    %v619 = vsel %vm618, %v611, %v615
    %v620 = vand.u32 2147483647, %v610
    %vm621 = vcmp.eq.f32.partialorder %v620, 8.507059e+37
    %v622 = vand.u32 %v610, 2147483648
    %v623 = vor.u32 1.1754944e-38, %v622
    %v624 = vsel %vm621, %v623, %v619
    %v625 = vmul.f32 1.0, %v624
    %v626 = vtanh.pop %v606
    %v627 = vmul.f32 %v625, %v569
    %629 = vrot.lane.b32.xlu0 %v626, 32
    %v630 = vpop.permute.xlu0 %629
    %v632 = vmul.f32 %v625, %v630
    %634 = vrot.lane.b32.xlu0 %v632, 32
    %v635 = vpop.permute.xlu0 %634
    %v637 = vadd.f32 %v627, %v635
    %v638 = vtanh.pop %v637
    %640 = vrot.lane.b32.xlu0 %v638, 32
    %v641 = vpop.permute.xlu0 %640
    %v643 = vmul.f32 %v625, %v641
    %645 = vrot.lane.b32.xlu0 %v643, 64
    %v646 = vpop.permute.xlu0 %645
    %s648 = scalar_lea.vmem [#allocation3], 24
    %649 = vst.msk [vmem:[%s648] sm:$0xff] %vm133, %v646
    %s650 = scalar_lea.vmem [#allocation2], 32
    %v651 = vld [vmem:[%s650] sm:$0xff]
    %v652 = vsel %vm133, %v646, 0
    %654 = vmatpush.msra.mxu0 0.0
    %655 = vmatpush.msra.mxu0 0.0
    %656 = vmatpush.msra.mxu0 0.0
    %657 = vmatpush.msra.mxu0 0.0
    %658 = vmatpush.msra.mxu0 0.0
    %659 = vmatpush.msra.mxu0 0.0
    %660 = vmatpush.msra.mxu0 0.0
    %661 = vmatpush.msra.mxu0 0.0
    %662 = vmatpush.msra.mxu0 0.0
    %663 = vmatpush.msra.mxu0 0.0
    %664 = vmatpush.msra.mxu0 0.0
    %665 = vmatpush.msra.mxu0 0.0
    %666 = vmatpush.msra.mxu0 %v322
    %667 = vmatpush.msra.mxu0 %v321
    %668 = vmatpush.msra.mxu0 %v320
    %669 = vmatpush.msra.mxu0 %v319
    %670 = vmatmul.f32.gmra.mxu0 %v652
    %v671 = vpop.f32.mrf.mxu0
    %v672 = vadd.f32 0.0, %v671
    %673 = vdwg.mxu0
    %v674 = vadd.f32 %v651, %v672
    %v675 = vxor.u32 %v674, 2147483648
    %v676 = vmul.f32 %v675, 1.442695
    %v677 = vpow.pop %v676
    %v678 = vadd.f32 %v677, 1.0
    %v679 = vrcp.pop %v678
    %v680 = vmul.f32 %v678, %v679
    %v681 = vsub.f32 1.0, %v680
    %v682 = vmul.f32 %v679, %v681
    %v683 = vadd.f32 %v679, %v682
    %vm684 = vweird.f32 %v678
    %vm685 = vweird.f32 %v679
    %vm686 = vmor %vm684, %vm685
    %v687 = vsel %vm686, %v679, %v683
    %v688 = vand.u32 2147483647, %v678
    %vm689 = vcmp.eq.f32.partialorder %v688, 8.507059e+37
    %v690 = vand.u32 %v678, 2147483648
    %v691 = vor.u32 1.1754944e-38, %v690
    %v692 = vsel %vm689, %v691, %v687
    %v693 = vmul.f32 1.0, %v692
    %v694 = vtanh.pop %v674
    %v695 = vmul.f32 %v693, %v637
    %697 = vrot.lane.b32.xlu0 %v694, 32
    %v698 = vpop.permute.xlu0 %697
    %v700 = vmul.f32 %v693, %v698
    %702 = vrot.lane.b32.xlu0 %v700, 32
    %v703 = vpop.permute.xlu0 %702
    %v705 = vadd.f32 %v695, %v703
    %v706 = vtanh.pop %v705
    %708 = vrot.lane.b32.xlu0 %v706, 32
    %v709 = vpop.permute.xlu0 %708
    %v711 = vmul.f32 %v693, %v709
    %713 = vrot.lane.b32.xlu0 %v711, 64
    %v714 = vpop.permute.xlu0 %713
    %s716 = scalar_lea.vmem [#allocation3], 32
    %717 = vst.msk [vmem:[%s716] sm:$0xff] %vm133, %v714
    %s718 = scalar_lea.vmem [#allocation2], 40
    %v719 = vld [vmem:[%s718] sm:$0xff]
    %v720 = vsel %vm133, %v714, 0
    %722 = vmatpush.msra.mxu0 0.0
    %723 = vmatpush.msra.mxu0 0.0
    %724 = vmatpush.msra.mxu0 0.0
    %725 = vmatpush.msra.mxu0 0.0
    %726 = vmatpush.msra.mxu0 0.0
    %727 = vmatpush.msra.mxu0 0.0
    %728 = vmatpush.msra.mxu0 0.0
    %729 = vmatpush.msra.mxu0 0.0
    %730 = vmatpush.msra.mxu0 0.0
    %731 = vmatpush.msra.mxu0 0.0
    %732 = vmatpush.msra.mxu0 0.0
    %733 = vmatpush.msra.mxu0 0.0
    %734 = vmatpush.msra.mxu0 %v322
    %735 = vmatpush.msra.mxu0 %v321
    %736 = vmatpush.msra.mxu0 %v320
    %737 = vmatpush.msra.mxu0 %v319
    %738 = vmatmul.f32.gmra.mxu0 %v720
    %v739 = vpop.f32.mrf.mxu0
    %v740 = vadd.f32 0.0, %v739
    %741 = vdwg.mxu0
    %v742 = vadd.f32 %v719, %v740
    %v743 = vxor.u32 %v742, 2147483648
    %v744 = vmul.f32 %v743, 1.442695
    %v745 = vpow.pop %v744
    %v746 = vadd.f32 %v745, 1.0
    %v747 = vrcp.pop %v746
    %v748 = vmul.f32 %v746, %v747
    %v749 = vsub.f32 1.0, %v748
    %v750 = vmul.f32 %v747, %v749
    %v751 = vadd.f32 %v747, %v750
    %vm752 = vweird.f32 %v746
    %vm753 = vweird.f32 %v747
    %vm754 = vmor %vm752, %vm753
    %v755 = vsel %vm754, %v747, %v751
    %v756 = vand.u32 2147483647, %v746
    %vm757 = vcmp.eq.f32.partialorder %v756, 8.507059e+37
    %v758 = vand.u32 %v746, 2147483648
    %v759 = vor.u32 1.1754944e-38, %v758
    %v760 = vsel %vm757, %v759, %v755
    %v761 = vmul.f32 1.0, %v760
    %v762 = vtanh.pop %v742
    %v763 = vmul.f32 %v761, %v705
    %765 = vrot.lane.b32.xlu0 %v762, 32
    %v766 = vpop.permute.xlu0 %765
    %v768 = vmul.f32 %v761, %v766
    %770 = vrot.lane.b32.xlu0 %v768, 32
    %v771 = vpop.permute.xlu0 %770
    %v773 = vadd.f32 %v763, %v771
    %v774 = vtanh.pop %v773
    %776 = vrot.lane.b32.xlu0 %v774, 32
    %v777 = vpop.permute.xlu0 %776
    %v779 = vmul.f32 %v761, %v777
    %781 = vrot.lane.b32.xlu0 %v779, 64
    %v782 = vpop.permute.xlu0 %781
    %s784 = scalar_lea.vmem [#allocation3], 40
    %785 = vst.msk [vmem:[%s784] sm:$0xff] %vm133, %v782
    %s786 = scalar_lea.vmem [#allocation2], 48
    %v787 = vld [vmem:[%s786] sm:$0xff]
    %v788 = vsel %vm133, %v782, 0
    %790 = vmatpush.msra.mxu0 0.0
    %791 = vmatpush.msra.mxu0 0.0
    %792 = vmatpush.msra.mxu0 0.0
    %793 = vmatpush.msra.mxu0 0.0
    %794 = vmatpush.msra.mxu0 0.0
    %795 = vmatpush.msra.mxu0 0.0
    %796 = vmatpush.msra.mxu0 0.0
    %797 = vmatpush.msra.mxu0 0.0
    %798 = vmatpush.msra.mxu0 0.0
    %799 = vmatpush.msra.mxu0 0.0
    %800 = vmatpush.msra.mxu0 0.0
    %801 = vmatpush.msra.mxu0 0.0
    %802 = vmatpush.msra.mxu0 %v322
    %803 = vmatpush.msra.mxu0 %v321
    %804 = vmatpush.msra.mxu0 %v320
    %805 = vmatpush.msra.mxu0 %v319
    %806 = vmatmul.f32.gmra.mxu0 %v788
    %v807 = vpop.f32.mrf.mxu0
    %v808 = vadd.f32 0.0, %v807
    %809 = vdwg.mxu0
    %v810 = vadd.f32 %v787, %v808
    %v811 = vxor.u32 %v810, 2147483648
    %v812 = vmul.f32 %v811, 1.442695
    %v813 = vpow.pop %v812
    %v814 = vadd.f32 %v813, 1.0
    %v815 = vrcp.pop %v814
    %v816 = vmul.f32 %v814, %v815
    %v817 = vsub.f32 1.0, %v816
    %v818 = vmul.f32 %v815, %v817
    %v819 = vadd.f32 %v815, %v818
    %vm820 = vweird.f32 %v814
    %vm821 = vweird.f32 %v815
    %vm822 = vmor %vm820, %vm821
    %v823 = vsel %vm822, %v815, %v819
    %v824 = vand.u32 2147483647, %v814
    %vm825 = vcmp.eq.f32.partialorder %v824, 8.507059e+37
    %v826 = vand.u32 %v814, 2147483648
    %v827 = vor.u32 1.1754944e-38, %v826
    %v828 = vsel %vm825, %v827, %v823
    %v829 = vmul.f32 1.0, %v828
    %v830 = vtanh.pop %v810
    %v831 = vmul.f32 %v829, %v773
    %833 = vrot.lane.b32.xlu0 %v830, 32
    %v834 = vpop.permute.xlu0 %833
    %v836 = vmul.f32 %v829, %v834
    %838 = vrot.lane.b32.xlu0 %v836, 32
    %v839 = vpop.permute.xlu0 %838
    %v841 = vadd.f32 %v831, %v839
    %v842 = vtanh.pop %v841
    %844 = vrot.lane.b32.xlu0 %v842, 32
    %v845 = vpop.permute.xlu0 %844
    %v847 = vmul.f32 %v829, %v845
    %849 = vrot.lane.b32.xlu0 %v847, 64
    %v850 = vpop.permute.xlu0 %849
    %s852 = scalar_lea.vmem [#allocation3], 48
    %853 = vst.msk [vmem:[%s852] sm:$0xff] %vm133, %v850
    %s854 = scalar_lea.vmem [#allocation2], 56
    %v855 = vld [vmem:[%s854] sm:$0xff]
    %v856 = vsel %vm133, %v850, 0
    %858 = vmatpush.msra.mxu0 0.0
    %859 = vmatpush.msra.mxu0 0.0
    %860 = vmatpush.msra.mxu0 0.0
    %861 = vmatpush.msra.mxu0 0.0
    %862 = vmatpush.msra.mxu0 0.0
    %863 = vmatpush.msra.mxu0 0.0
    %864 = vmatpush.msra.mxu0 0.0
    %865 = vmatpush.msra.mxu0 0.0
    %866 = vmatpush.msra.mxu0 0.0
    %867 = vmatpush.msra.mxu0 0.0
    %868 = vmatpush.msra.mxu0 0.0
    %869 = vmatpush.msra.mxu0 0.0
    %870 = vmatpush.msra.mxu0 %v322
    %871 = vmatpush.msra.mxu0 %v321
    %872 = vmatpush.msra.mxu0 %v320
    %873 = vmatpush.msra.mxu0 %v319
    %874 = vmatmul.f32.gmra.mxu0 %v856
    %v875 = vpop.f32.mrf.mxu0
    %v876 = vadd.f32 0.0, %v875
    %877 = vdwg.mxu0
    %v878 = vadd.f32 %v855, %v876
    %v879 = vxor.u32 %v878, 2147483648
    %v880 = vmul.f32 %v879, 1.442695
    %v881 = vpow.pop %v880
    %v882 = vadd.f32 %v881, 1.0
    %v883 = vrcp.pop %v882
    %v884 = vmul.f32 %v882, %v883
    %v885 = vsub.f32 1.0, %v884
    %v886 = vmul.f32 %v883, %v885
    %v887 = vadd.f32 %v883, %v886
    %vm888 = vweird.f32 %v882
    %vm889 = vweird.f32 %v883
    %vm890 = vmor %vm888, %vm889
    %v891 = vsel %vm890, %v883, %v887
    %v892 = vand.u32 2147483647, %v882
    %vm893 = vcmp.eq.f32.partialorder %v892, 8.507059e+37
    %v894 = vand.u32 %v882, 2147483648
    %v895 = vor.u32 1.1754944e-38, %v894
    %v896 = vsel %vm893, %v895, %v891
    %v897 = vmul.f32 1.0, %v896
    %v898 = vtanh.pop %v878
    %v899 = vmul.f32 %v897, %v841
    %901 = vrot.lane.b32.xlu0 %v898, 32
    %v902 = vpop.permute.xlu0 %901
    %v904 = vmul.f32 %v897, %v902
    %906 = vrot.lane.b32.xlu0 %v904, 32
    %v907 = vpop.permute.xlu0 %906
    %v909 = vadd.f32 %v899, %v907
    %v910 = vtanh.pop %v909
    %912 = vrot.lane.b32.xlu0 %v910, 32
    %v913 = vpop.permute.xlu0 %912
    %v915 = vmul.f32 %v897, %v913
    %917 = vrot.lane.b32.xlu0 %v915, 64
    %v918 = vpop.permute.xlu0 %917
    %s920 = scalar_lea.vmem [#allocation3], 56
    %921 = vst.msk [vmem:[%s920] sm:$0xff] %vm133, %v918
    %vm922 = vcmask 254976
    %923 = vst.msk [vmem:[#allocation12] sm:$0x3] %vm922, %v918
    %925 = vrot.lane.b32.xlu0 %v909, 96
    %v926 = vpop.permute.xlu0 %925
    %928 = vst.msk [vmem:[#allocation13] sm:$0x3] %vm922, %v926
    %v929 = vld [vmem:[#allocation3] sm:$0xff]
    %v930 = vld [vmem:[#allocation3 + $0x8] sm:$0xff]
    %v931 = vld [vmem:[#allocation3 + $0x10] sm:$0xff]
    %v932 = vld [vmem:[#allocation3 + $0x18] sm:$0xff]
    %v933 = vld [vmem:[#allocation3 + $0x20] sm:$0xff]
    %v934 = vld [vmem:[#allocation3 + $0x28] sm:$0xff]
    %v935 = vld [vmem:[#allocation3 + $0x30] sm:$0xff]
    %v936 = vld [vmem:[#allocation3 + $0x38] sm:$0xff]
    %v937 = vld [vmem:[#allocation4 + $0xe0] sm:$0xff]
    %v938 = vld [vmem:[#allocation4 + $0xe8] sm:$0xff]
    %v939 = vld [vmem:[#allocation4 + $0xf0] sm:$0xff]
    %v940 = vld [vmem:[#allocation4 + $0xf8] sm:$0xff]
    %v941 = vld [vmem:[#allocation4 + $0x120] sm:$0xff]
    %v942 = vperm.slane %v941, 0
    %v944 = vsel %vm133, %v929, 0
    %v947 = vsel %vm133, %v930, 0
    %v950 = vsel %vm133, %v931, 0
    %v953 = vsel %vm133, %v932, 0
    %v956 = vsel %vm133, %v933, 0
    %v959 = vsel %vm133, %v934, 0
    %v962 = vsel %vm133, %v935, 0
    %v965 = vsel %vm133, %v936, 0
    %967 = vmatpush.msra.mxu0 0.0
    %968 = vmatpush.msra.mxu0 0.0
    %969 = vmatpush.msra.mxu0 0.0
    %970 = vmatpush.msra.mxu0 0.0
    %971 = vmatpush.msra.mxu0 0.0
    %972 = vmatpush.msra.mxu0 0.0
    %973 = vmatpush.msra.mxu0 0.0
    %974 = vmatpush.msra.mxu0 0.0
    %975 = vmatpush.msra.mxu0 0.0
    %976 = vmatpush.msra.mxu0 0.0
    %977 = vmatpush.msra.mxu0 0.0
    %978 = vmatpush.msra.mxu0 0.0
    %979 = vmatpush.msra.mxu0 %v940
    %980 = vmatpush.msra.mxu0 %v939
    %981 = vmatpush.msra.mxu0 %v938
    %982 = vmatpush.msra.mxu0 %v937
    %983 = vmatmul.f32.gmra.mxu0 %v944
    %v984 = vpop.f32.mrf.mxu0
    %v985 = vadd.f32 %v942, %v984
    %986 = vmatmul.f32.gmra.mxu0 %v947
    %v987 = vpop.f32.mrf.mxu0
    %v988 = vadd.f32 %v942, %v987
    %989 = vmatmul.f32.gmra.mxu0 %v950
    %v990 = vpop.f32.mrf.mxu0
    %v991 = vadd.f32 %v942, %v990
    %992 = vmatmul.f32.gmra.mxu0 %v953
    %v993 = vpop.f32.mrf.mxu0
    %v994 = vadd.f32 %v942, %v993
    %995 = vmatmul.f32.gmra.mxu0 %v956
    %v996 = vpop.f32.mrf.mxu0
    %v997 = vadd.f32 %v942, %v996
    %998 = vmatmul.f32.gmra.mxu0 %v959
    %v999 = vpop.f32.mrf.mxu0
    %v1000 = vadd.f32 %v942, %v999
    %1001 = vmatmul.f32.gmra.mxu0 %v962
    %v1002 = vpop.f32.mrf.mxu0
    %v1003 = vadd.f32 %v942, %v1002
    %1004 = vmatmul.f32.gmra.mxu0 %v965
    %v1005 = vpop.f32.mrf.mxu0
    %v1006 = vadd.f32 %v942, %v1005
    %1007 = vdwg.mxu0
    %1008 = vst [vmem:[#allocation2] sm:$0xff] %v985
    %1009 = vst [vmem:[#allocation2 + $0x8] sm:$0xff] %v988
    %1010 = vst [vmem:[#allocation2 + $0x10] sm:$0xff] %v991
    %1011 = vst [vmem:[#allocation2 + $0x18] sm:$0xff] %v994
    %1012 = vst [vmem:[#allocation2 + $0x20] sm:$0xff] %v997
    %1013 = vst [vmem:[#allocation2 + $0x28] sm:$0xff] %v1000
    %1014 = vst [vmem:[#allocation2 + $0x30] sm:$0xff] %v1003
    %1015 = vst [vmem:[#allocation2 + $0x38] sm:$0xff] %v1006
    %v1016 = vld [vmem:[#allocation4 + $0x100] sm:$0xff]
    %v1017 = vld [vmem:[#allocation4 + $0x108] sm:$0xff]
    %v1018 = vld [vmem:[#allocation4 + $0x110] sm:$0xff]
    %v1019 = vld [vmem:[#allocation4 + $0x118] sm:$0xff]
    %s1020 = scalar_lea.vmem [#allocation9], 2
    %v1021 = vld [vmem:[%s1020] sm:$0x3]
    %v1023 = vsel %vm98, %v1021, 0
    %1025 = vmatpush.msra.mxu0 0.0
    %1026 = vmatpush.msra.mxu0 0.0
    %1027 = vmatpush.msra.mxu0 0.0
    %1028 = vmatpush.msra.mxu0 0.0
    %1029 = vmatpush.msra.mxu0 0.0
    %1030 = vmatpush.msra.mxu0 0.0
    %1031 = vmatpush.msra.mxu0 0.0
    %1032 = vmatpush.msra.mxu0 0.0
    %1033 = vmatpush.msra.mxu0 0.0
    %1034 = vmatpush.msra.mxu0 0.0
    %1035 = vmatpush.msra.mxu0 0.0
    %1036 = vmatpush.msra.mxu0 0.0
    %1037 = vmatpush.msra.mxu0 0.0
    %1038 = vmatpush.msra.mxu0 0.0
    %1039 = vmatpush.msra.mxu0 0.0
    %1040 = vmatpush.msra.mxu0 %v1023
    %1041 = vmatmul.f32.gmra.mxu0 %v326
    %v1042 = vpop.f32.mrf.mxu0
    %v1043 = vadd.f32 0.0, %v1042
    %1044 = vdwg.mxu0
    %s1045 = scalar_lea.vmem [#allocation10], 2
    %v1046 = vld [vmem:[%s1045] sm:$0x3]
    %v1048 = vsel %vm98, %v1046, 0
    %1050 = vmatpush.msra.mxu0 0.0
    %1051 = vmatpush.msra.mxu0 0.0
    %1052 = vmatpush.msra.mxu0 0.0
    %1053 = vmatpush.msra.mxu0 0.0
    %1054 = vmatpush.msra.mxu0 0.0
    %1055 = vmatpush.msra.mxu0 0.0
    %1056 = vmatpush.msra.mxu0 0.0
    %1057 = vmatpush.msra.mxu0 0.0
    %1058 = vmatpush.msra.mxu0 0.0
    %1059 = vmatpush.msra.mxu0 0.0
    %1060 = vmatpush.msra.mxu0 0.0
    %1061 = vmatpush.msra.mxu0 0.0
    %1062 = vmatpush.msra.mxu0 0.0
    %1063 = vmatpush.msra.mxu0 0.0
    %1064 = vmatpush.msra.mxu0 0.0
    %1065 = vmatpush.msra.mxu0 %v1048
    %1066 = vmatmul.f32.gmra.mxu0 %v326
    %v1067 = vpop.f32.mrf.mxu0
    %v1068 = vadd.f32 0.0, %v1067
    %1069 = vdwg.mxu0
    %v1070 = vld [vmem:[#allocation2] sm:$0xff]
    %v1072 = vsel %vm133, %v1043, 0
    %1074 = vmatpush.msra.mxu0 0.0
    %1075 = vmatpush.msra.mxu0 0.0
    %1076 = vmatpush.msra.mxu0 0.0
    %1077 = vmatpush.msra.mxu0 0.0
    %1078 = vmatpush.msra.mxu0 0.0
    %1079 = vmatpush.msra.mxu0 0.0
    %1080 = vmatpush.msra.mxu0 0.0
    %1081 = vmatpush.msra.mxu0 0.0
    %1082 = vmatpush.msra.mxu0 0.0
    %1083 = vmatpush.msra.mxu0 0.0
    %1084 = vmatpush.msra.mxu0 0.0
    %1085 = vmatpush.msra.mxu0 0.0
    %1086 = vmatpush.msra.mxu0 %v1019
    %1087 = vmatpush.msra.mxu0 %v1018
    %1088 = vmatpush.msra.mxu0 %v1017
    %1089 = vmatpush.msra.mxu0 %v1016
    %1090 = vmatmul.f32.gmra.mxu0 %v1072
    %v1091 = vpop.f32.mrf.mxu0
    %v1092 = vadd.f32 0.0, %v1091
    %1093 = vdwg.mxu0
    %v1094 = vadd.f32 %v1070, %v1092
    %v1095 = vxor.u32 %v1094, 2147483648
    %v1096 = vmul.f32 %v1095, 1.442695
    %v1097 = vpow.pop %v1096
    %v1098 = vadd.f32 %v1097, 1.0
    %v1099 = vrcp.pop %v1098
    %v1100 = vmul.f32 %v1098, %v1099
    %v1101 = vsub.f32 1.0, %v1100
    %v1102 = vmul.f32 %v1099, %v1101
    %v1103 = vadd.f32 %v1099, %v1102
    %vm1104 = vweird.f32 %v1098
    %vm1105 = vweird.f32 %v1099
    %vm1106 = vmor %vm1104, %vm1105
    %v1107 = vsel %vm1106, %v1099, %v1103
    %v1108 = vand.u32 2147483647, %v1098
    %vm1109 = vcmp.eq.f32.partialorder %v1108, 8.507059e+37
    %v1110 = vand.u32 %v1098, 2147483648
    %v1111 = vor.u32 1.1754944e-38, %v1110
    %v1112 = vsel %vm1109, %v1111, %v1107
    %v1113 = vmul.f32 1.0, %v1112
    %v1114 = vtanh.pop %v1094
    %1116 = vrot.lane.b32.xlu0 %v1068, 32
    %v1117 = vpop.permute.xlu0 %1116
    %v1119 = vmul.f32 %v1113, %v1117
    %1121 = vrot.lane.b32.xlu0 %v1114, 32
    %v1122 = vpop.permute.xlu0 %1121
    %v1124 = vmul.f32 %v1113, %v1122
    %1126 = vrot.lane.b32.xlu0 %v1124, 32
    %v1127 = vpop.permute.xlu0 %1126
    %v1129 = vadd.f32 %v1119, %v1127
    %v1130 = vtanh.pop %v1129
    %1132 = vrot.lane.b32.xlu0 %v1130, 32
    %v1133 = vpop.permute.xlu0 %1132
    %v1135 = vmul.f32 %v1113, %v1133
    %1137 = vrot.lane.b32.xlu0 %v1135, 64
    %v1138 = vpop.permute.xlu0 %1137
    %1140 = vst.msk [vmem:[#allocation3] sm:$0xff] %vm133, %v1138
    %v1141 = vld [vmem:[%s446] sm:$0xff]
    %v1142 = vsel %vm133, %v1138, 0
    %1144 = vmatpush.msra.mxu0 0.0
    %1145 = vmatpush.msra.mxu0 0.0
    %1146 = vmatpush.msra.mxu0 0.0
    %1147 = vmatpush.msra.mxu0 0.0
    %1148 = vmatpush.msra.mxu0 0.0
    %1149 = vmatpush.msra.mxu0 0.0
    %1150 = vmatpush.msra.mxu0 0.0
    %1151 = vmatpush.msra.mxu0 0.0
    %1152 = vmatpush.msra.mxu0 0.0
    %1153 = vmatpush.msra.mxu0 0.0
    %1154 = vmatpush.msra.mxu0 0.0
    %1155 = vmatpush.msra.mxu0 0.0
    %1156 = vmatpush.msra.mxu0 %v1019
    %1157 = vmatpush.msra.mxu0 %v1018
    %1158 = vmatpush.msra.mxu0 %v1017
    %1159 = vmatpush.msra.mxu0 %v1016
    %1160 = vmatmul.f32.gmra.mxu0 %v1142
    %v1161 = vpop.f32.mrf.mxu0
    %v1162 = vadd.f32 0.0, %v1161
    %1163 = vdwg.mxu0
    %v1164 = vadd.f32 %v1141, %v1162
    %v1165 = vxor.u32 %v1164, 2147483648
    %v1166 = vmul.f32 %v1165, 1.442695
    %v1167 = vpow.pop %v1166
    %v1168 = vadd.f32 %v1167, 1.0
    %v1169 = vrcp.pop %v1168
    %v1170 = vmul.f32 %v1168, %v1169
    %v1171 = vsub.f32 1.0, %v1170
    %v1172 = vmul.f32 %v1169, %v1171
    %v1173 = vadd.f32 %v1169, %v1172
    %vm1174 = vweird.f32 %v1168
    %vm1175 = vweird.f32 %v1169
    %vm1176 = vmor %vm1174, %vm1175
    %v1177 = vsel %vm1176, %v1169, %v1173
    %v1178 = vand.u32 2147483647, %v1168
    %vm1179 = vcmp.eq.f32.partialorder %v1178, 8.507059e+37
    %v1180 = vand.u32 %v1168, 2147483648
    %v1181 = vor.u32 1.1754944e-38, %v1180
    %v1182 = vsel %vm1179, %v1181, %v1177
    %v1183 = vmul.f32 1.0, %v1182
    %v1184 = vtanh.pop %v1164
    %v1185 = vmul.f32 %v1183, %v1129
    %1187 = vrot.lane.b32.xlu0 %v1184, 32
    %v1188 = vpop.permute.xlu0 %1187
    %v1190 = vmul.f32 %v1183, %v1188
    %1192 = vrot.lane.b32.xlu0 %v1190, 32
    %v1193 = vpop.permute.xlu0 %1192
    %v1195 = vadd.f32 %v1185, %v1193
    %v1196 = vtanh.pop %v1195
    %1198 = vrot.lane.b32.xlu0 %v1196, 32
    %v1199 = vpop.permute.xlu0 %1198
    %v1201 = vmul.f32 %v1183, %v1199
    %1203 = vrot.lane.b32.xlu0 %v1201, 64
    %v1204 = vpop.permute.xlu0 %1203
    %1206 = vst.msk [vmem:[%s512] sm:$0xff] %vm133, %v1204
    %v1207 = vld [vmem:[%s514] sm:$0xff]
    %v1208 = vsel %vm133, %v1204, 0
    %1210 = vmatpush.msra.mxu0 0.0
    %1211 = vmatpush.msra.mxu0 0.0
    %1212 = vmatpush.msra.mxu0 0.0
    %1213 = vmatpush.msra.mxu0 0.0
    %1214 = vmatpush.msra.mxu0 0.0
    %1215 = vmatpush.msra.mxu0 0.0
    %1216 = vmatpush.msra.mxu0 0.0
    %1217 = vmatpush.msra.mxu0 0.0
    %1218 = vmatpush.msra.mxu0 0.0
    %1219 = vmatpush.msra.mxu0 0.0
    %1220 = vmatpush.msra.mxu0 0.0
    %1221 = vmatpush.msra.mxu0 0.0
    %1222 = vmatpush.msra.mxu0 %v1019
    %1223 = vmatpush.msra.mxu0 %v1018
    %1224 = vmatpush.msra.mxu0 %v1017
    %1225 = vmatpush.msra.mxu0 %v1016
    %1226 = vmatmul.f32.gmra.mxu0 %v1208
    %v1227 = vpop.f32.mrf.mxu0
    %v1228 = vadd.f32 0.0, %v1227
    %1229 = vdwg.mxu0
    %v1230 = vadd.f32 %v1207, %v1228
    %v1231 = vxor.u32 %v1230, 2147483648
    %v1232 = vmul.f32 %v1231, 1.442695
    %v1233 = vpow.pop %v1232
    %v1234 = vadd.f32 %v1233, 1.0
    %v1235 = vrcp.pop %v1234
    %v1236 = vmul.f32 %v1234, %v1235
    %v1237 = vsub.f32 1.0, %v1236
    %v1238 = vmul.f32 %v1235, %v1237
    %v1239 = vadd.f32 %v1235, %v1238
    %vm1240 = vweird.f32 %v1234
    %vm1241 = vweird.f32 %v1235
    %vm1242 = vmor %vm1240, %vm1241
    %v1243 = vsel %vm1242, %v1235, %v1239
    %v1244 = vand.u32 2147483647, %v1234
    %vm1245 = vcmp.eq.f32.partialorder %v1244, 8.507059e+37
    %v1246 = vand.u32 %v1234, 2147483648
    %v1247 = vor.u32 1.1754944e-38, %v1246
    %v1248 = vsel %vm1245, %v1247, %v1243
    %v1249 = vmul.f32 1.0, %v1248
    %v1250 = vtanh.pop %v1230
    %v1251 = vmul.f32 %v1249, %v1195
    %1253 = vrot.lane.b32.xlu0 %v1250, 32
    %v1254 = vpop.permute.xlu0 %1253
    %v1256 = vmul.f32 %v1249, %v1254
    %1258 = vrot.lane.b32.xlu0 %v1256, 32
    %v1259 = vpop.permute.xlu0 %1258
    %v1261 = vadd.f32 %v1251, %v1259
    %v1262 = vtanh.pop %v1261
    %1264 = vrot.lane.b32.xlu0 %v1262, 32
    %v1265 = vpop.permute.xlu0 %1264
    %v1267 = vmul.f32 %v1249, %v1265
    %1269 = vrot.lane.b32.xlu0 %v1267, 64
    %v1270 = vpop.permute.xlu0 %1269
    %1272 = vst.msk [vmem:[%s580] sm:$0xff] %vm133, %v1270
    %v1273 = vld [vmem:[%s582] sm:$0xff]
    %v1274 = vsel %vm133, %v1270, 0
    %1276 = vmatpush.msra.mxu0 0.0
    %1277 = vmatpush.msra.mxu0 0.0
    %1278 = vmatpush.msra.mxu0 0.0
    %1279 = vmatpush.msra.mxu0 0.0
    %1280 = vmatpush.msra.mxu0 0.0
    %1281 = vmatpush.msra.mxu0 0.0
    %1282 = vmatpush.msra.mxu0 0.0
    %1283 = vmatpush.msra.mxu0 0.0
    %1284 = vmatpush.msra.mxu0 0.0
    %1285 = vmatpush.msra.mxu0 0.0
    %1286 = vmatpush.msra.mxu0 0.0
    %1287 = vmatpush.msra.mxu0 0.0
    %1288 = vmatpush.msra.mxu0 %v1019
    %1289 = vmatpush.msra.mxu0 %v1018
    %1290 = vmatpush.msra.mxu0 %v1017
    %1291 = vmatpush.msra.mxu0 %v1016
    %1292 = vmatmul.f32.gmra.mxu0 %v1274
    %v1293 = vpop.f32.mrf.mxu0
    %v1294 = vadd.f32 0.0, %v1293
    %1295 = vdwg.mxu0
    %v1296 = vadd.f32 %v1273, %v1294
    %v1297 = vxor.u32 %v1296, 2147483648
    %v1298 = vmul.f32 %v1297, 1.442695
    %v1299 = vpow.pop %v1298
    %v1300 = vadd.f32 %v1299, 1.0
    %v1301 = vrcp.pop %v1300
    %v1302 = vmul.f32 %v1300, %v1301
    %v1303 = vsub.f32 1.0, %v1302
    %v1304 = vmul.f32 %v1301, %v1303
    %v1305 = vadd.f32 %v1301, %v1304
    %vm1306 = vweird.f32 %v1300
    %vm1307 = vweird.f32 %v1301
    %vm1308 = vmor %vm1306, %vm1307
    %v1309 = vsel %vm1308, %v1301, %v1305
    %v1310 = vand.u32 2147483647, %v1300
    %vm1311 = vcmp.eq.f32.partialorder %v1310, 8.507059e+37
    %v1312 = vand.u32 %v1300, 2147483648
    %v1313 = vor.u32 1.1754944e-38, %v1312
    %v1314 = vsel %vm1311, %v1313, %v1309
    %v1315 = vmul.f32 1.0, %v1314
    %v1316 = vtanh.pop %v1296
    %v1317 = vmul.f32 %v1315, %v1261
    %1319 = vrot.lane.b32.xlu0 %v1316, 32
    %v1320 = vpop.permute.xlu0 %1319
    %v1322 = vmul.f32 %v1315, %v1320
    %1324 = vrot.lane.b32.xlu0 %v1322, 32
    %v1325 = vpop.permute.xlu0 %1324
    %v1327 = vadd.f32 %v1317, %v1325
    %v1328 = vtanh.pop %v1327
    %1330 = vrot.lane.b32.xlu0 %v1328, 32
    %v1331 = vpop.permute.xlu0 %1330
    %v1333 = vmul.f32 %v1315, %v1331
    %1335 = vrot.lane.b32.xlu0 %v1333, 64
    %v1336 = vpop.permute.xlu0 %1335
    %1338 = vst.msk [vmem:[%s648] sm:$0xff] %vm133, %v1336
    %v1339 = vld [vmem:[%s650] sm:$0xff]
    %v1340 = vsel %vm133, %v1336, 0
    %1342 = vmatpush.msra.mxu0 0.0
    %1343 = vmatpush.msra.mxu0 0.0
    %1344 = vmatpush.msra.mxu0 0.0
    %1345 = vmatpush.msra.mxu0 0.0
    %1346 = vmatpush.msra.mxu0 0.0
    %1347 = vmatpush.msra.mxu0 0.0
    %1348 = vmatpush.msra.mxu0 0.0
    %1349 = vmatpush.msra.mxu0 0.0
    %1350 = vmatpush.msra.mxu0 0.0
    %1351 = vmatpush.msra.mxu0 0.0
    %1352 = vmatpush.msra.mxu0 0.0
    %1353 = vmatpush.msra.mxu0 0.0
    %1354 = vmatpush.msra.mxu0 %v1019
    %1355 = vmatpush.msra.mxu0 %v1018
    %1356 = vmatpush.msra.mxu0 %v1017
    %1357 = vmatpush.msra.mxu0 %v1016
    %1358 = vmatmul.f32.gmra.mxu0 %v1340
    %v1359 = vpop.f32.mrf.mxu0
    %v1360 = vadd.f32 0.0, %v1359
    %1361 = vdwg.mxu0
    %v1362 = vadd.f32 %v1339, %v1360
    %v1363 = vxor.u32 %v1362, 2147483648
    %v1364 = vmul.f32 %v1363, 1.442695
    %v1365 = vpow.pop %v1364
    %v1366 = vadd.f32 %v1365, 1.0
    %v1367 = vrcp.pop %v1366
    %v1368 = vmul.f32 %v1366, %v1367
    %v1369 = vsub.f32 1.0, %v1368
    %v1370 = vmul.f32 %v1367, %v1369
    %v1371 = vadd.f32 %v1367, %v1370
    %vm1372 = vweird.f32 %v1366
    %vm1373 = vweird.f32 %v1367
    %vm1374 = vmor %vm1372, %vm1373
    %v1375 = vsel %vm1374, %v1367, %v1371
    %v1376 = vand.u32 2147483647, %v1366
    %vm1377 = vcmp.eq.f32.partialorder %v1376, 8.507059e+37
    %v1378 = vand.u32 %v1366, 2147483648
    %v1379 = vor.u32 1.1754944e-38, %v1378
    %v1380 = vsel %vm1377, %v1379, %v1375
    %v1381 = vmul.f32 1.0, %v1380
    %v1382 = vtanh.pop %v1362
    %v1383 = vmul.f32 %v1381, %v1327
    %1385 = vrot.lane.b32.xlu0 %v1382, 32
    %v1386 = vpop.permute.xlu0 %1385
    %v1388 = vmul.f32 %v1381, %v1386
    %1390 = vrot.lane.b32.xlu0 %v1388, 32
    %v1391 = vpop.permute.xlu0 %1390
    %v1393 = vadd.f32 %v1383, %v1391
    %v1394 = vtanh.pop %v1393
    %1396 = vrot.lane.b32.xlu0 %v1394, 32
    %v1397 = vpop.permute.xlu0 %1396
    %v1399 = vmul.f32 %v1381, %v1397
    %1401 = vrot.lane.b32.xlu0 %v1399, 64
    %v1402 = vpop.permute.xlu0 %1401
    %1404 = vst.msk [vmem:[%s716] sm:$0xff] %vm133, %v1402
    %v1405 = vld [vmem:[%s718] sm:$0xff]
    %v1406 = vsel %vm133, %v1402, 0
    %1408 = vmatpush.msra.mxu0 0.0
    %1409 = vmatpush.msra.mxu0 0.0
    %1410 = vmatpush.msra.mxu0 0.0
    %1411 = vmatpush.msra.mxu0 0.0
    %1412 = vmatpush.msra.mxu0 0.0
    %1413 = vmatpush.msra.mxu0 0.0
    %1414 = vmatpush.msra.mxu0 0.0
    %1415 = vmatpush.msra.mxu0 0.0
    %1416 = vmatpush.msra.mxu0 0.0
    %1417 = vmatpush.msra.mxu0 0.0
    %1418 = vmatpush.msra.mxu0 0.0
    %1419 = vmatpush.msra.mxu0 0.0
    %1420 = vmatpush.msra.mxu0 %v1019
    %1421 = vmatpush.msra.mxu0 %v1018
    %1422 = vmatpush.msra.mxu0 %v1017
    %1423 = vmatpush.msra.mxu0 %v1016
    %1424 = vmatmul.f32.gmra.mxu0 %v1406
    %v1425 = vpop.f32.mrf.mxu0
    %v1426 = vadd.f32 0.0, %v1425
    %1427 = vdwg.mxu0
    %v1428 = vadd.f32 %v1405, %v1426
    %v1429 = vxor.u32 %v1428, 2147483648
    %v1430 = vmul.f32 %v1429, 1.442695
    %v1431 = vpow.pop %v1430
    %v1432 = vadd.f32 %v1431, 1.0
    %v1433 = vrcp.pop %v1432
    %v1434 = vmul.f32 %v1432, %v1433
    %v1435 = vsub.f32 1.0, %v1434
    %v1436 = vmul.f32 %v1433, %v1435
    %v1437 = vadd.f32 %v1433, %v1436
    %vm1438 = vweird.f32 %v1432
    %vm1439 = vweird.f32 %v1433
    %vm1440 = vmor %vm1438, %vm1439
    %v1441 = vsel %vm1440, %v1433, %v1437
    %v1442 = vand.u32 2147483647, %v1432
    %vm1443 = vcmp.eq.f32.partialorder %v1442, 8.507059e+37
    %v1444 = vand.u32 %v1432, 2147483648
    %v1445 = vor.u32 1.1754944e-38, %v1444
    %v1446 = vsel %vm1443, %v1445, %v1441
    %v1447 = vmul.f32 1.0, %v1446
    %v1448 = vtanh.pop %v1428
    %v1449 = vmul.f32 %v1447, %v1393
    %1451 = vrot.lane.b32.xlu0 %v1448, 32
    %v1452 = vpop.permute.xlu0 %1451
    %v1454 = vmul.f32 %v1447, %v1452
    %1456 = vrot.lane.b32.xlu0 %v1454, 32
    %v1457 = vpop.permute.xlu0 %1456
    %v1459 = vadd.f32 %v1449, %v1457
    %v1460 = vtanh.pop %v1459
    %1462 = vrot.lane.b32.xlu0 %v1460, 32
    %v1463 = vpop.permute.xlu0 %1462
    %v1465 = vmul.f32 %v1447, %v1463
    %1467 = vrot.lane.b32.xlu0 %v1465, 64
    %v1468 = vpop.permute.xlu0 %1467
    %1470 = vst.msk [vmem:[%s784] sm:$0xff] %vm133, %v1468
    %v1471 = vld [vmem:[%s786] sm:$0xff]
    %v1472 = vsel %vm133, %v1468, 0
    %1474 = vmatpush.msra.mxu0 0.0
    %1475 = vmatpush.msra.mxu0 0.0
    %1476 = vmatpush.msra.mxu0 0.0
    %1477 = vmatpush.msra.mxu0 0.0
    %1478 = vmatpush.msra.mxu0 0.0
    %1479 = vmatpush.msra.mxu0 0.0
    %1480 = vmatpush.msra.mxu0 0.0
    %1481 = vmatpush.msra.mxu0 0.0
    %1482 = vmatpush.msra.mxu0 0.0
    %1483 = vmatpush.msra.mxu0 0.0
    %1484 = vmatpush.msra.mxu0 0.0
    %1485 = vmatpush.msra.mxu0 0.0
    %1486 = vmatpush.msra.mxu0 %v1019
    %1487 = vmatpush.msra.mxu0 %v1018
    %1488 = vmatpush.msra.mxu0 %v1017
    %1489 = vmatpush.msra.mxu0 %v1016
    %1490 = vmatmul.f32.gmra.mxu0 %v1472
    %v1491 = vpop.f32.mrf.mxu0
    %v1492 = vadd.f32 0.0, %v1491
    %1493 = vdwg.mxu0
    %v1494 = vadd.f32 %v1471, %v1492
    %v1495 = vxor.u32 %v1494, 2147483648
    %v1496 = vmul.f32 %v1495, 1.442695
    %v1497 = vpow.pop %v1496
    %v1498 = vadd.f32 %v1497, 1.0
    %v1499 = vrcp.pop %v1498
    %v1500 = vmul.f32 %v1498, %v1499
    %v1501 = vsub.f32 1.0, %v1500
    %v1502 = vmul.f32 %v1499, %v1501
    %v1503 = vadd.f32 %v1499, %v1502
    %vm1504 = vweird.f32 %v1498
    %vm1505 = vweird.f32 %v1499
    %vm1506 = vmor %vm1504, %vm1505
    %v1507 = vsel %vm1506, %v1499, %v1503
    %v1508 = vand.u32 2147483647, %v1498
    %vm1509 = vcmp.eq.f32.partialorder %v1508, 8.507059e+37
    %v1510 = vand.u32 %v1498, 2147483648
    %v1511 = vor.u32 1.1754944e-38, %v1510
    %v1512 = vsel %vm1509, %v1511, %v1507
    %v1513 = vmul.f32 1.0, %v1512
    %v1514 = vtanh.pop %v1494
    %v1515 = vmul.f32 %v1513, %v1459
    %1517 = vrot.lane.b32.xlu0 %v1514, 32
    %v1518 = vpop.permute.xlu0 %1517
    %v1520 = vmul.f32 %v1513, %v1518
    %1522 = vrot.lane.b32.xlu0 %v1520, 32
    %v1523 = vpop.permute.xlu0 %1522
    %v1525 = vadd.f32 %v1515, %v1523
    %v1526 = vtanh.pop %v1525
    %1528 = vrot.lane.b32.xlu0 %v1526, 32
    %v1529 = vpop.permute.xlu0 %1528
    %v1531 = vmul.f32 %v1513, %v1529
    %1533 = vrot.lane.b32.xlu0 %v1531, 64
    %v1534 = vpop.permute.xlu0 %1533
    %1536 = vst.msk [vmem:[%s852] sm:$0xff] %vm133, %v1534
    %v1537 = vld [vmem:[%s854] sm:$0xff]
    %v1538 = vsel %vm133, %v1534, 0
    %1540 = vmatpush.msra.mxu0 0.0
    %1541 = vmatpush.msra.mxu0 0.0
    %1542 = vmatpush.msra.mxu0 0.0
    %1543 = vmatpush.msra.mxu0 0.0
    %1544 = vmatpush.msra.mxu0 0.0
    %1545 = vmatpush.msra.mxu0 0.0
    %1546 = vmatpush.msra.mxu0 0.0
    %1547 = vmatpush.msra.mxu0 0.0
    %1548 = vmatpush.msra.mxu0 0.0
    %1549 = vmatpush.msra.mxu0 0.0
    %1550 = vmatpush.msra.mxu0 0.0
    %1551 = vmatpush.msra.mxu0 0.0
    %1552 = vmatpush.msra.mxu0 %v1019
    %1553 = vmatpush.msra.mxu0 %v1018
    %1554 = vmatpush.msra.mxu0 %v1017
    %1555 = vmatpush.msra.mxu0 %v1016
    %1556 = vmatmul.f32.gmra.mxu0 %v1538
    %v1557 = vpop.f32.mrf.mxu0
    %v1558 = vadd.f32 0.0, %v1557
    %1559 = vdwg.mxu0
    %v1560 = vadd.f32 %v1537, %v1558
    %v1561 = vxor.u32 %v1560, 2147483648
    %v1562 = vmul.f32 %v1561, 1.442695
    %v1563 = vpow.pop %v1562
    %v1564 = vadd.f32 %v1563, 1.0
    %v1565 = vrcp.pop %v1564
    %v1566 = vmul.f32 %v1564, %v1565
    %v1567 = vsub.f32 1.0, %v1566
    %v1568 = vmul.f32 %v1565, %v1567
    %v1569 = vadd.f32 %v1565, %v1568
    %vm1570 = vweird.f32 %v1564
    %vm1571 = vweird.f32 %v1565
    %vm1572 = vmor %vm1570, %vm1571
    %v1573 = vsel %vm1572, %v1565, %v1569
    %v1574 = vand.u32 2147483647, %v1564
    %vm1575 = vcmp.eq.f32.partialorder %v1574, 8.507059e+37
    %v1576 = vand.u32 %v1564, 2147483648
    %v1577 = vor.u32 1.1754944e-38, %v1576
    %v1578 = vsel %vm1575, %v1577, %v1573
    %v1579 = vmul.f32 1.0, %v1578
    %v1580 = vtanh.pop %v1560
    %v1581 = vmul.f32 %v1579, %v1525
    %1583 = vrot.lane.b32.xlu0 %v1580, 32
    %v1584 = vpop.permute.xlu0 %1583
    %v1586 = vmul.f32 %v1579, %v1584
    %1588 = vrot.lane.b32.xlu0 %v1586, 32
    %v1589 = vpop.permute.xlu0 %1588
    %v1591 = vadd.f32 %v1581, %v1589
    %v1592 = vtanh.pop %v1591
    %1594 = vrot.lane.b32.xlu0 %v1592, 32
    %v1595 = vpop.permute.xlu0 %1594
    %v1597 = vmul.f32 %v1579, %v1595
    %1599 = vrot.lane.b32.xlu0 %v1597, 64
    %v1600 = vpop.permute.xlu0 %1599
    %1602 = vst.msk [vmem:[%s920] sm:$0xff] %vm133, %v1600
    %s1603 = scalar_lea.vmem [#allocation12], 2
    %1604 = vst.msk [vmem:[%s1603] sm:$0x3] %vm922, %v1600
    %1606 = vrot.lane.b32.xlu0 %v1591, 96
    %v1607 = vpop.permute.xlu0 %1606
    %s1609 = scalar_lea.vmem [#allocation13], 2
    %1610 = vst.msk [vmem:[%s1609] sm:$0x3] %vm922, %v1607
    %v1611 = vld [vmem:[#allocation4 + $0x40] sm:$0xff]
    %v1612 = vld [vmem:[#allocation4 + $0x48] sm:$0xff]
    %v1613 = vld [vmem:[#allocation3] sm:$0xff]
    %v1614 = vld [vmem:[#allocation3 + $0x8] sm:$0xff]
    %v1615 = vld [vmem:[#allocation3 + $0x10] sm:$0xff]
    %v1616 = vld [vmem:[#allocation3 + $0x18] sm:$0xff]
    %v1617 = vld [vmem:[#allocation3 + $0x20] sm:$0xff]
    %v1618 = vld [vmem:[#allocation3 + $0x28] sm:$0xff]
    %v1619 = vld [vmem:[#allocation3 + $0x30] sm:$0xff]
    %v1620 = vld [vmem:[#allocation3 + $0x38] sm:$0xff]
    %vm1621 = vcmask 523264
    %v1623 = vsel %vm1621, %v1611, 0
    %v1626 = vsel %vm1621, %v1612, 0
    %1628 = vmatpush.msra.mxu0 0.0
    %1629 = vmatpush.msra.mxu0 0.0
    %1630 = vmatpush.msra.mxu0 0.0
    %1631 = vmatpush.msra.mxu0 0.0
    %1632 = vmatpush.msra.mxu0 0.0
    %1633 = vmatpush.msra.mxu0 0.0
    %1634 = vmatpush.msra.mxu0 0.0
    %1635 = vmatpush.msra.mxu0 0.0
    %1636 = vmatpush.msra.mxu0 %v1620
    %1637 = vmatpush.msra.mxu0 %v1619
    %1638 = vmatpush.msra.mxu0 %v1618
    %1639 = vmatpush.msra.mxu0 %v1617
    %1640 = vmatpush.msra.mxu0 %v1616
    %1641 = vmatpush.msra.mxu0 %v1615
    %1642 = vmatpush.msra.mxu0 %v1614
    %1643 = vmatpush.msra.mxu0 %v1613
    %1644 = vmatmul.f32.gmra.mxu0 %v1623
    %v1645 = vpop.f32.mrf.mxu0
    %v1646 = vadd.f32 0.0, %v1645
    %1647 = vmatmul.f32.gmra.mxu0 %v1626
    %v1648 = vpop.f32.mrf.mxu0
    %v1649 = vadd.f32 0.0, %v1648
    %1650 = vdwg.mxu0
    %v1651 = vld [vmem:[#allocation4 + $0x128] sm:$0xff]
    %v1652 = vld [vmem:[#allocation4 + $0x130] sm:$0xff]
    %v1653 = vld [vmem:[#allocation4 + $0x138] sm:$0xff]
    %v1654 = vld [vmem:[#allocation4 + $0x140] sm:$0xff]
    %v1655 = vld [vmem:[#allocation4 + $0x148] sm:$0xff]
    %v1656 = vperm.slane %v1655, 0
    %v1658 = vsel %vm133, %v1646, 0
    %v1661 = vsel %vm133, %v1649, 0
    %1663 = vmatpush.msra.mxu0 0.0
    %1664 = vmatpush.msra.mxu0 0.0
    %1665 = vmatpush.msra.mxu0 0.0
    %1666 = vmatpush.msra.mxu0 0.0
    %1667 = vmatpush.msra.mxu0 0.0
    %1668 = vmatpush.msra.mxu0 0.0
    %1669 = vmatpush.msra.mxu0 0.0
    %1670 = vmatpush.msra.mxu0 0.0
    %1671 = vmatpush.msra.mxu0 0.0
    %1672 = vmatpush.msra.mxu0 0.0
    %1673 = vmatpush.msra.mxu0 0.0
    %1674 = vmatpush.msra.mxu0 0.0
    %1675 = vmatpush.msra.mxu0 %v1654
    %1676 = vmatpush.msra.mxu0 %v1653
    %1677 = vmatpush.msra.mxu0 %v1652
    %1678 = vmatpush.msra.mxu0 %v1651
    %1679 = vmatmul.f32.gmra.mxu0 %v1658
    %v1680 = vpop.f32.mrf.mxu0
    %v1681 = vadd.f32 %v1656, %v1680
    %1682 = vmatmul.f32.gmra.mxu0 %v1661
    %v1683 = vpop.f32.mrf.mxu0
    %v1684 = vadd.f32 %v1656, %v1683
    %1685 = vdwg.mxu0
    %1686 = vst [vmem:[%s4] sm:$0xff] %v1681
    %1687 = vst [vmem:[%s4 + $0x8] sm:$0xff] %v1684
    // Predicated region
    $region34: #{forward.1} parent=1 // pred_check
      _
    $region35: #{forward.1} parent=1 // pred_check_branch
      %1689 = sbr.rel (0) target = $region37
    $region36: #{forward.1} parent=1 // pred_region
      _
    $region37: #{forward.1} parent=1 // pred_fallthru
      _
    // Predicated region
    $region38: #{forward.1} parent=1 // pred_check
      _
    $region39: #{forward.1} parent=1 // pred_check_branch
      %1691 = sbr.rel (0) target = $region41
    $region40: #{forward.1} parent=1 // pred_region
      %1693 = vsyncadd [#allocation6], 0
      %s1694 = sshll.u32 [#allocation12], 4
      %s1695 = int_to_ptr.vmem [resolvable:$true] %s1694
      %s1696 = sshll.u32 %s5, 4
      %s1697 = int_to_ptr.hbm [resolvable:$true] %s1696
      %1702 = dma.vmem_to_hbm [thread:$0]  %s1695, 64, %s1697, [#allocation6], 32, 32, 2
    $region41: #{forward.1} parent=1 // pred_fallthru
      _
    // Predicated region
    $region42: #{forward.1} parent=1 // pred_check
      _
    $region43: #{forward.1} parent=1 // pred_check_branch
      %1704 = sbr.rel (0) target = $region45
    $region44: #{forward.1} parent=1 // pred_region
      %1706 = vsyncadd [#allocation14], 0
      %s1707 = sshll.u32 [#allocation13], 4
      %s1708 = int_to_ptr.vmem [resolvable:$true] %s1707
      %s1709 = sshll.u32 %s6, 4
      %s1710 = int_to_ptr.hbm [resolvable:$true] %s1709
      %1715 = dma.vmem_to_hbm [thread:$0]  %s1708, 64, %s1710, [#allocation14], 32, 32, 2
    $region45: #{forward.1} parent=1 // pred_fallthru
      _
    // Predicated region
    $region46: #{forward.1} parent=1 // pred_check
      _
    $region47: #{forward.1} parent=1 // pred_check_branch
      %1717 = sbr.rel (0) target = $region49
    $region48: #{forward.1} parent=1 // pred_region
      _
    $region49: #{forward.1} parent=1 // pred_fallthru
      _
    // Predicated region
    $region50: #{forward.1} parent=1 // pred_check
      _
    $region51: #{forward.1} parent=1 // pred_check_branch
      %1719 = sbr.rel (0) target = $region53
    $region52: #{forward.1} parent=1 // pred_region
      %1721 = dma.done [#allocation6], 64
    $region53: #{forward.1} parent=1 // pred_fallthru
      _
    // Predicated region
    $region54: #{forward.1} parent=1 // pred_check
      _
    $region55: #{forward.1} parent=1 // pred_check_branch
      %1723 = sbr.rel (0) target = $region57
    $region56: #{forward.1} parent=1 // pred_region
      %1725 = dma.done [#allocation14], 64
    $region57: #{forward.1} parent=1 // pred_fallthru
      _
    %1726 = vsyncpa [#allocation5], 1
    %1727 = vsyncpa [#allocation8], 1
    %1728 = vsyncpa [#allocation11], 1
    %1729 = vsyncpa [#allocation6], 1
    %1730 = vsyncpa [#allocation14], 1

</llo_original>
